<compile_context>
chip_gen: v7x
topology: tpu7x:2x2x1
jax: 0.10.0
libtpu: 0.0.40
codegen_flags: <defaults>
</compile_context>

<pallas_src>
import functools

import jax
import jax.numpy as jnp
from jax import lax
from jax.experimental import pallas as pl
from jax.experimental.pallas import tpu as pltpu

BN_EPSILON = 0.001  # matches the PyTorch module (eps is set explicitly there)


def _dw3x3(v, w, stride):
    """Depthwise 3x3 conv, 'same' padding, on a (H, W, C) f32 value.

    Returns (ceil(H/stride), W, C); W-direction subsampling (stride > 1) is
    applied by the caller with a single reshape.
    """
    H, W, C = v.shape
    # Row padding first (leading dim -> cheap, layout-free): (H+2, W, C).
    zr = jnp.zeros((1, W, C), jnp.float32)
    vp = jnp.concatenate([zr, v, zr], axis=0)
    # Column-shifted variants of the padded map (the only sublane-axis work;
    # each shift is shared by the 3 row taps of that column offset):
    #   cols[dj][i, w] = vp[i, w + dj - 1]  (0 when out of bounds)
    zc = jnp.zeros((H + 2, 1, C), jnp.float32)
    cols = [
        jnp.concatenate([zc, vp[:, :W - 1, :]], axis=1),   # w - 1
        vp,                                                 # w
        jnp.concatenate([vp[:, 1:, :], zc], axis=1),        # w + 1
    ]
    # Accumulate the 9 taps; init from the center tap (no zero-fill).
    acc = cols[1][1:1 + H:stride] * w[1, 1, :]
    for di in range(3):
        for dj in range(3):
            if di == 1 and dj == 1:
                continue
            acc = acc + cols[dj][di:di + H:stride] * w[di, dj, :]
    return acc


def _sandglass_kernel(x_ref,
                      wdw1_ref, b1_ref,
                      wpw_ref, bpw_ref,
                      wdw2_ref, b4_ref,
                      o_ref,
                      *, stride, residual):
    H, W, Cin = x_ref.shape[1], x_ref.shape[2], x_ref.shape[3]
    Ho, Wo, Cout = o_ref.shape[1], o_ref.shape[2], o_ref.shape[3]

    x = x_ref[0].astype(jnp.float32)                       # (H, W, Cin)

    # ---- depthwise 3x3, stride 1 (BN scale folded into weights) + ReLU6 ---
    w1 = wdw1_ref[...].astype(jnp.float32)                 # (3, 3, Cin)
    y = jnp.clip(_dw3x3(x, w1, 1) + b1_ref[0], 0.0, 6.0)   # (H, W, Cin)

    # ---- fused 1x1 reduce -> BN -> 1x1 expand -> BN  (one matmul) + ReLU6 -
    # W is a multiple of 8, so merging (H, W) -> H*W is tile-aligned (cheap).
    y = y.reshape(H * W, Cin)
    y = jnp.dot(y, wpw_ref[...], preferred_element_type=jnp.float32)
    y = jnp.clip(y + bpw_ref[0], 0.0, 6.0)
    y = y.reshape(H, W, Cout)

    # ---- depthwise 3x3, stride s (BN scale folded into weights) -----------
    w2 = wdw2_ref[...].astype(jnp.float32)                 # (3, 3, Cout)
    out = _dw3x3(y, w2, stride)                            # (Ho, W, Cout)
    if stride > 1:
        out = out.reshape(Ho, Wo, stride, Cout)[:, :, 0, :]
    out = out + b4_ref[0]

    if residual:
        out = out + x

    o_ref[0] = out.astype(o_ref.dtype)


def sandglass_block(x, p, *, stride):
    """x: (N, H, W, Cin) float32, NHWC layout."""
    N, H, W, Cin = x.shape
    Cmid = p["wpw1"].shape[1]
    Cout = p["wpw2"].shape[1]
    residual = (Cin == Cout) and (stride == 1)
    Ho = (H - 1) // stride + 1
    Wo = (W - 1) // stride + 1
    if stride > 1:
        assert H % stride == 0 and W % stride == 0

    # ------------------ host-side BN folding (inference) -------------------
    s1 = p["s1"].reshape(Cin)
    b1 = p["b1"].reshape(1, Cin)
    s2 = p["s2"].reshape(Cmid)
    b2 = p["b2"].reshape(Cmid)
    s3 = p["s3"].reshape(Cout)
    b3 = p["b3"].reshape(Cout)
    s4 = p["s4"].reshape(Cout)
    b4 = p["b4"].reshape(1, Cout)

    wdw1 = p["wdw1"] * s1                                   # (3, 3, Cin)
    wdw2 = p["wdw2"] * s4                                   # (3, 3, Cout)
    # ((y @ A) * s2 + b2) @ B * s3 + b3  ==  y @ Wpw + bpw
    b_scaled = p["wpw2"] * s3[None, :]                      # (Cmid, Cout)
    wpw = (p["wpw1"] * s2[None, :]) @ b_scaled              # (Cin, Cout)
    bpw = (b2 @ b_scaled + b3).reshape(1, Cout)             # (1, Cout)

    kernel = functools.partial(_sandglass_kernel, stride=stride,
                               residual=residual)

    def full(rank):
        return lambda n: (0,) * rank

    in_specs = [
        pl.BlockSpec((1, H, W, Cin), lambda n: (n, 0, 0, 0)),   # x
        pl.BlockSpec((3, 3, Cin), full(3)),                      # wdw1 (folded)
        pl.BlockSpec((1, Cin), full(2)),                         # b1
        pl.BlockSpec((Cin, Cout), full(2)),                      # wpw (fused)
        pl.BlockSpec((1, Cout), full(2)),                        # bpw
        pl.BlockSpec((3, 3, Cout), full(3)),                     # wdw2 (folded)
        pl.BlockSpec((1, Cout), full(2)),                        # b4
    ]
    out_specs = pl.BlockSpec((1, Ho, Wo, Cout), lambda n: (n, 0, 0, 0))

    flops = N * (17 * H * W * Cin                # dw1 (9 mul + 8 add per pix)
                 + 2 * H * W * Cin * Cout        # fused pointwise matmul
                 + 17 * Ho * W * Cout            # dw2 (H-strided taps)
                 + 4 * H * W * max(Cin, Cout))   # bias / clip / residual
    bytes_accessed = 4 * (x.size + N * Ho * Wo * Cout
                          + wdw1.size + wdw2.size + wpw.size
                          + Cin + 2 * Cout)

    return pl.pallas_call(
        kernel,
        out_shape=jax.ShapeDtypeStruct((N, Ho, Wo, Cout), x.dtype),
        grid_spec=pltpu.PrefetchScalarGridSpec(
            num_scalar_prefetch=0,
            grid=(N,),
            in_specs=in_specs,
            out_specs=out_specs,
        ),
        compiler_params=pltpu.CompilerParams(
            dimension_semantics=("parallel",),
            vmem_limit_bytes=32 * 1024 * 1024),
        cost_estimate=pl.CostEstimate(
            flops=flops, transcendentals=0, bytes_accessed=bytes_accessed),
    )(x, wdw1, b1, wpw, bpw, wdw2, b4)


def init_params(key, in_channels, out_channels, reduction):
    cmid = in_channels // reduction
    ks = jax.random.split(key, 8)

    def bn(k, c):
        k1, k2, k3, k4 = jax.random.split(k, 4)
        gamma = jax.random.uniform(k1, (c,), jnp.float32, 0.5, 1.5)
        beta = jax.random.normal(k2, (c,), jnp.float32) * 0.1
        mean = jax.random.normal(k3, (c,), jnp.float32) * 0.1
        var = jax.random.uniform(k4, (c,), jnp.float32, 0.5, 1.5)
        scale = gamma / jnp.sqrt(var + BN_EPSILON)
        shift = beta - mean * scale
        return scale.reshape(1, c), shift.reshape(1, c)

    wdw1 = jax.random.normal(ks[0], (3, 3, in_channels), jnp.float32) * 0.2
    s1, b1 = bn(ks[1], in_channels)
    wpw1 = jax.random.normal(ks[2], (in_channels, cmid), jnp.float32) * 0.2
    s2, b2 = bn(ks[3], cmid)
    wpw2 = jax.random.normal(ks[4], (cmid, out_channels), jnp.float32) * 0.2
    s3, b3 = bn(ks[5], out_channels)
    wdw2 = jax.random.normal(ks[6], (3, 3, out_channels), jnp.float32) * 0.2
    s4, b4 = bn(ks[7], out_channels)
    return dict(wdw1=wdw1, s1=s1, b1=b1, wpw1=wpw1, s2=s2, b2=b2,
                wpw2=wpw2, s3=s3, b3=b3, wdw2=wdw2, s4=s4, b4=b4)


def reference(x, p, *, stride):
    """Plain-JAX reference (NHWC) mirroring the PyTorch forward (unfolded)."""
    def dw(t, w, s):
        c = w.shape[-1]
        return lax.conv_general_dilated(
            t, w.reshape(3, 3, 1, c), window_strides=(s, s),
            padding=((1, 1), (1, 1)),
            dimension_numbers=("NHWC", "HWIO", "NHWC"),
            feature_group_count=c)

    def pw(t, w):
        return lax.conv_general_dilated(
            t, w.reshape(1, 1, *w.shape), window_strides=(1, 1),
            padding="VALID", dimension_numbers=("NHWC", "HWIO", "NHWC"))

    Cin, Cout = x.shape[-1], p["wpw2"].shape[1]
    residual = (Cin == Cout) and (stride == 1)
    y = jnp.clip(dw(x, p["wdw1"], 1) * p["s1"] + p["b1"], 0.0, 6.0)
    y = pw(y, p["wpw1"]) * p["s2"] + p["b2"]
    y = jnp.clip(pw(y, p["wpw2"]) * p["s3"] + p["b3"], 0.0, 6.0)
    y = dw(y, p["wdw2"], stride) * p["s4"] + p["b4"]
    return y + x if residual else y


if __name__ == "__main__":
    # Small, residual configuration: in_channels == out_channels, stride == 1.
    N, H, W = 2, 16, 16
    in_channels, out_channels, stride, reduction = 8, 8, 1, 2

    key = jax.random.PRNGKey(0)
    kx, kp = jax.random.split(key)
    x = jax.random.normal(kx, (N, H, W, in_channels), jnp.float32)
    params = init_params(kp, in_channels, out_channels, reduction)

    out = sandglass_block(x, params, stride=stride)
    out = jax.block_until_ready(out)

    ref = jax.block_until_ready(reference(x, params, stride=stride))
    assert out.shape == ref.shape, (out.shape, ref.shape)
    err = float(jnp.max(jnp.abs(out - ref)))
    assert err < 1e-3, f"max abs err {err}"

    print("KERNEL_OK")
</pallas_src>

<mosaic_0001>
module attributes {stable_mosaic.version = 11 : i64} {
  func.func @_sandglass_kernel(%arg0: i32, %arg1: memref<1x16x16x8xf32, #tpu.memory_space<vmem>>, %arg2: memref<3x3x8xf32, #tpu.memory_space<vmem>>, %arg3: memref<1x8xf32, #tpu.memory_space<vmem>>, %arg4: memref<8x8xf32, #tpu.memory_space<vmem>>, %arg5: memref<1x8xf32, #tpu.memory_space<vmem>>, %arg6: memref<3x3x8xf32, #tpu.memory_space<vmem>>, %arg7: memref<1x8xf32, #tpu.memory_space<vmem>>, %arg8: memref<1x16x16x8xf32, #tpu.memory_space<vmem>>) attributes {dimension_semantics = [#tpu.dimension_semantics<parallel>], iteration_bounds = array<i64: 2>, scalar_prefetch = 0 : i64, scratch_operands = 0 : i64, tpu.core_type = #tpu.core_type<tc>, window_params = [{transform_indices = @transform_0, window_bounds = array<i64: 1, 16, 16, 8>}, {pipeline_mode = #tpu.pipeline_mode<synchronous>, transform_indices = @transform_1, window_bounds = array<i64: 3, 3, 8>}, {pipeline_mode = #tpu.pipeline_mode<synchronous>, transform_indices = @transform_2, window_bounds = array<i64: 1, 8>}, {pipeline_mode = #tpu.pipeline_mode<synchronous>, transform_indices = @transform_3, window_bounds = array<i64: 8, 8>}, {pipeline_mode = #tpu.pipeline_mode<synchronous>, transform_indices = @transform_4, window_bounds = array<i64: 1, 8>}, {pipeline_mode = #tpu.pipeline_mode<synchronous>, transform_indices = @transform_5, window_bounds = array<i64: 3, 3, 8>}, {pipeline_mode = #tpu.pipeline_mode<synchronous>, transform_indices = @transform_6, window_bounds = array<i64: 1, 8>}, {transform_indices = @transform_7, window_bounds = array<i64: 1, 16, 16, 8>}]} {
    %c0 = arith.constant 0 : index
    %c0_0 = arith.constant 0 : index
    %c0_1 = arith.constant 0 : index
    %c0_2 = arith.constant 0 : index
    %0 = vector.load %arg1[%c0, %c0_0, %c0_1, %c0_2] : memref<1x16x16x8xf32, #tpu.memory_space<vmem>>, vector<1x16x16x8xf32>
    %1 = vector.shape_cast %0 : vector<1x16x16x8xf32> to vector<16x16x8xf32>
    %c0_3 = arith.constant 0 : index
    %c0_4 = arith.constant 0 : index
    %c0_5 = arith.constant 0 : index
    %2 = vector.load %arg2[%c0_3, %c0_4, %c0_5] : memref<3x3x8xf32, #tpu.memory_space<vmem>>, vector<3x3x8xf32>
    %cst = arith.constant 0.000000e+00 : f32
    %3 = vector.broadcast %cst : f32 to vector<1x16x8xf32>
    %4 = tpu.concatenate %3, %1, %3 in 0 : vector<1x16x8xf32>, vector<16x16x8xf32>, vector<1x16x8xf32> -> vector<18x16x8xf32>
    %cst_6 = arith.constant 0.000000e+00 : f32
    %5 = vector.broadcast %cst_6 : f32 to vector<18x1x8xf32>
    %6 = vector.extract_strided_slice %4 {offsets = [0, 0, 0], sizes = [18, 15, 8], strides = [1, 1, 1]} : vector<18x16x8xf32> to vector<18x15x8xf32>
    %7 = tpu.concatenate %5, %6 in 1 : vector<18x1x8xf32>, vector<18x15x8xf32> -> vector<18x16x8xf32>
    %8 = vector.extract_strided_slice %4 {offsets = [0, 1, 0], sizes = [18, 15, 8], strides = [1, 1, 1]} : vector<18x16x8xf32> to vector<18x15x8xf32>
    %9 = tpu.concatenate %8, %5 in 1 : vector<18x15x8xf32>, vector<18x1x8xf32> -> vector<18x16x8xf32>
    %10 = vector.extract_strided_slice %4 {offsets = [1, 0, 0], sizes = [16, 16, 8], strides = [1, 1, 1]} : vector<18x16x8xf32> to vector<16x16x8xf32>
    %11 = vector.extract_strided_slice %2 {offsets = [1, 1, 0], sizes = [1, 1, 8], strides = [1, 1, 1]} : vector<3x3x8xf32> to vector<1x1x8xf32>
    %12 = vector.shape_cast %11 : vector<1x1x8xf32> to vector<8xf32>
    %13 = vector.shape_cast %12 : vector<8xf32> to vector<1x1x8xf32>
    %14 = vector.broadcast %13 : vector<1x1x8xf32> to vector<16x16x8xf32>
    %15 = arith.mulf %10, %14 : vector<16x16x8xf32>
    %16 = vector.extract_strided_slice %7 {offsets = [0, 0, 0], sizes = [16, 16, 8], strides = [1, 1, 1]} : vector<18x16x8xf32> to vector<16x16x8xf32>
    %17 = vector.extract_strided_slice %2 {offsets = [0, 0, 0], sizes = [1, 1, 8], strides = [1, 1, 1]} : vector<3x3x8xf32> to vector<1x1x8xf32>
    %18 = vector.shape_cast %17 : vector<1x1x8xf32> to vector<8xf32>
    %19 = vector.shape_cast %18 : vector<8xf32> to vector<1x1x8xf32>
    %20 = vector.broadcast %19 : vector<1x1x8xf32> to vector<16x16x8xf32>
    %21 = arith.mulf %16, %20 : vector<16x16x8xf32>
    %22 = arith.addf %15, %21 : vector<16x16x8xf32>
    %23 = vector.extract_strided_slice %4 {offsets = [0, 0, 0], sizes = [16, 16, 8], strides = [1, 1, 1]} : vector<18x16x8xf32> to vector<16x16x8xf32>
    %24 = vector.extract_strided_slice %2 {offsets = [0, 1, 0], sizes = [1, 1, 8], strides = [1, 1, 1]} : vector<3x3x8xf32> to vector<1x1x8xf32>
    %25 = vector.shape_cast %24 : vector<1x1x8xf32> to vector<8xf32>
    %26 = vector.shape_cast %25 : vector<8xf32> to vector<1x1x8xf32>
    %27 = vector.broadcast %26 : vector<1x1x8xf32> to vector<16x16x8xf32>
    %28 = arith.mulf %23, %27 : vector<16x16x8xf32>
    %29 = arith.addf %22, %28 : vector<16x16x8xf32>
    %30 = vector.extract_strided_slice %9 {offsets = [0, 0, 0], sizes = [16, 16, 8], strides = [1, 1, 1]} : vector<18x16x8xf32> to vector<16x16x8xf32>
    %31 = vector.extract_strided_slice %2 {offsets = [0, 2, 0], sizes = [1, 1, 8], strides = [1, 1, 1]} : vector<3x3x8xf32> to vector<1x1x8xf32>
    %32 = vector.shape_cast %31 : vector<1x1x8xf32> to vector<8xf32>
    %33 = vector.shape_cast %32 : vector<8xf32> to vector<1x1x8xf32>
    %34 = vector.broadcast %33 : vector<1x1x8xf32> to vector<16x16x8xf32>
    %35 = arith.mulf %30, %34 : vector<16x16x8xf32>
    %36 = arith.addf %29, %35 : vector<16x16x8xf32>
    %37 = vector.extract_strided_slice %7 {offsets = [1, 0, 0], sizes = [16, 16, 8], strides = [1, 1, 1]} : vector<18x16x8xf32> to vector<16x16x8xf32>
    %38 = vector.extract_strided_slice %2 {offsets = [1, 0, 0], sizes = [1, 1, 8], strides = [1, 1, 1]} : vector<3x3x8xf32> to vector<1x1x8xf32>
    %39 = vector.shape_cast %38 : vector<1x1x8xf32> to vector<8xf32>
    %40 = vector.shape_cast %39 : vector<8xf32> to vector<1x1x8xf32>
    %41 = vector.broadcast %40 : vector<1x1x8xf32> to vector<16x16x8xf32>
    %42 = arith.mulf %37, %41 : vector<16x16x8xf32>
    %43 = arith.addf %36, %42 : vector<16x16x8xf32>
    %44 = vector.extract_strided_slice %9 {offsets = [1, 0, 0], sizes = [16, 16, 8], strides = [1, 1, 1]} : vector<18x16x8xf32> to vector<16x16x8xf32>
    %45 = vector.extract_strided_slice %2 {offsets = [1, 2, 0], sizes = [1, 1, 8], strides = [1, 1, 1]} : vector<3x3x8xf32> to vector<1x1x8xf32>
    %46 = vector.shape_cast %45 : vector<1x1x8xf32> to vector<8xf32>
    %47 = vector.shape_cast %46 : vector<8xf32> to vector<1x1x8xf32>
    %48 = vector.broadcast %47 : vector<1x1x8xf32> to vector<16x16x8xf32>
    %49 = arith.mulf %44, %48 : vector<16x16x8xf32>
    %50 = arith.addf %43, %49 : vector<16x16x8xf32>
    %51 = vector.extract_strided_slice %7 {offsets = [2, 0, 0], sizes = [16, 16, 8], strides = [1, 1, 1]} : vector<18x16x8xf32> to vector<16x16x8xf32>
    %52 = vector.extract_strided_slice %2 {offsets = [2, 0, 0], sizes = [1, 1, 8], strides = [1, 1, 1]} : vector<3x3x8xf32> to vector<1x1x8xf32>
    %53 = vector.shape_cast %52 : vector<1x1x8xf32> to vector<8xf32>
    %54 = vector.shape_cast %53 : vector<8xf32> to vector<1x1x8xf32>
    %55 = vector.broadcast %54 : vector<1x1x8xf32> to vector<16x16x8xf32>
    %56 = arith.mulf %51, %55 : vector<16x16x8xf32>
    %57 = arith.addf %50, %56 : vector<16x16x8xf32>
    %58 = vector.extract_strided_slice %4 {offsets = [2, 0, 0], sizes = [16, 16, 8], strides = [1, 1, 1]} : vector<18x16x8xf32> to vector<16x16x8xf32>
    %59 = vector.extract_strided_slice %2 {offsets = [2, 1, 0], sizes = [1, 1, 8], strides = [1, 1, 1]} : vector<3x3x8xf32> to vector<1x1x8xf32>
    %60 = vector.shape_cast %59 : vector<1x1x8xf32> to vector<8xf32>
    %61 = vector.shape_cast %60 : vector<8xf32> to vector<1x1x8xf32>
    %62 = vector.broadcast %61 : vector<1x1x8xf32> to vector<16x16x8xf32>
    %63 = arith.mulf %58, %62 : vector<16x16x8xf32>
    %64 = arith.addf %57, %63 : vector<16x16x8xf32>
    %65 = vector.extract_strided_slice %9 {offsets = [2, 0, 0], sizes = [16, 16, 8], strides = [1, 1, 1]} : vector<18x16x8xf32> to vector<16x16x8xf32>
    %66 = vector.extract_strided_slice %2 {offsets = [2, 2, 0], sizes = [1, 1, 8], strides = [1, 1, 1]} : vector<3x3x8xf32> to vector<1x1x8xf32>
    %67 = vector.shape_cast %66 : vector<1x1x8xf32> to vector<8xf32>
    %68 = vector.shape_cast %67 : vector<8xf32> to vector<1x1x8xf32>
    %69 = vector.broadcast %68 : vector<1x1x8xf32> to vector<16x16x8xf32>
    %70 = arith.mulf %65, %69 : vector<16x16x8xf32>
    %71 = arith.addf %64, %70 : vector<16x16x8xf32>
    %c0_7 = arith.constant 0 : index
    %c0_8 = arith.constant 0 : index
    %72 = vector.load %arg3[%c0_7, %c0_8] : memref<1x8xf32, #tpu.memory_space<vmem>>, vector<1x8xf32>
    %73 = vector.shape_cast %72 : vector<1x8xf32> to vector<8xf32>
    %74 = vector.shape_cast %73 : vector<8xf32> to vector<1x1x8xf32>
    %75 = vector.broadcast %74 : vector<1x1x8xf32> to vector<16x16x8xf32>
    %76 = arith.addf %71, %75 : vector<16x16x8xf32>
    %cst_9 = arith.constant 0.000000e+00 : f32
    %cst_10 = arith.constant 6.000000e+00 : f32
    %77 = vector.broadcast %cst_9 : f32 to vector<16x16x8xf32>
    %78 = arith.maximumf %77, %76 : vector<16x16x8xf32>
    %79 = vector.broadcast %cst_10 : f32 to vector<16x16x8xf32>
    %80 = arith.minimumf %79, %78 : vector<16x16x8xf32>
    %81 = vector.shape_cast %80 : vector<16x16x8xf32> to vector<256x8xf32>
    %c0_11 = arith.constant 0 : index
    %c0_12 = arith.constant 0 : index
    %82 = vector.load %arg4[%c0_11, %c0_12] : memref<8x8xf32, #tpu.memory_space<vmem>>, vector<8x8xf32>
    %cst_13 = arith.constant dense<0.000000e+00> : vector<256x8xf32>
    %83 = tpu.matmul %81, %82, %cst_13 {dimension_numbers = #tpu.dot_dimension_numbers<[1], [0], [0], [1], [0, 0, 1, 1], [], []>} : vector<256x8xf32>, vector<8x8xf32>, vector<256x8xf32> -> vector<256x8xf32>
    %c0_14 = arith.constant 0 : index
    %c0_15 = arith.constant 0 : index
    %84 = vector.load %arg5[%c0_14, %c0_15] : memref<1x8xf32, #tpu.memory_space<vmem>>, vector<1x8xf32>
    %85 = vector.shape_cast %84 : vector<1x8xf32> to vector<8xf32>
    %86 = vector.shape_cast %85 : vector<8xf32> to vector<1x8xf32>
    %87 = vector.broadcast %86 : vector<1x8xf32> to vector<256x8xf32>
    %88 = arith.addf %83, %87 : vector<256x8xf32>
    %cst_16 = arith.constant 0.000000e+00 : f32
    %cst_17 = arith.constant 6.000000e+00 : f32
    %89 = vector.broadcast %cst_16 : f32 to vector<256x8xf32>
    %90 = arith.maximumf %89, %88 : vector<256x8xf32>
    %91 = vector.broadcast %cst_17 : f32 to vector<256x8xf32>
    %92 = arith.minimumf %91, %90 : vector<256x8xf32>
    %93 = vector.shape_cast %92 : vector<256x8xf32> to vector<16x16x8xf32>
    %c0_18 = arith.constant 0 : index
    %c0_19 = arith.constant 0 : index
    %c0_20 = arith.constant 0 : index
    %94 = vector.load %arg6[%c0_18, %c0_19, %c0_20] : memref<3x3x8xf32, #tpu.memory_space<vmem>>, vector<3x3x8xf32>
    %cst_21 = arith.constant 0.000000e+00 : f32
    %95 = vector.broadcast %cst_21 : f32 to vector<1x16x8xf32>
    %96 = tpu.concatenate %95, %93, %95 in 0 : vector<1x16x8xf32>, vector<16x16x8xf32>, vector<1x16x8xf32> -> vector<18x16x8xf32>
    %cst_22 = arith.constant 0.000000e+00 : f32
    %97 = vector.broadcast %cst_22 : f32 to vector<18x1x8xf32>
    %98 = vector.extract_strided_slice %96 {offsets = [0, 0, 0], sizes = [18, 15, 8], strides = [1, 1, 1]} : vector<18x16x8xf32> to vector<18x15x8xf32>
    %99 = tpu.concatenate %97, %98 in 1 : vector<18x1x8xf32>, vector<18x15x8xf32> -> vector<18x16x8xf32>
    %100 = vector.extract_strided_slice %96 {offsets = [0, 1, 0], sizes = [18, 15, 8], strides = [1, 1, 1]} : vector<18x16x8xf32> to vector<18x15x8xf32>
    %101 = tpu.concatenate %100, %97 in 1 : vector<18x15x8xf32>, vector<18x1x8xf32> -> vector<18x16x8xf32>
    %102 = vector.extract_strided_slice %96 {offsets = [1, 0, 0], sizes = [16, 16, 8], strides = [1, 1, 1]} : vector<18x16x8xf32> to vector<16x16x8xf32>
    %103 = vector.extract_strided_slice %94 {offsets = [1, 1, 0], sizes = [1, 1, 8], strides = [1, 1, 1]} : vector<3x3x8xf32> to vector<1x1x8xf32>
    %104 = vector.shape_cast %103 : vector<1x1x8xf32> to vector<8xf32>
    %105 = vector.shape_cast %104 : vector<8xf32> to vector<1x1x8xf32>
    %106 = vector.broadcast %105 : vector<1x1x8xf32> to vector<16x16x8xf32>
    %107 = arith.mulf %102, %106 : vector<16x16x8xf32>
    %108 = vector.extract_strided_slice %99 {offsets = [0, 0, 0], sizes = [16, 16, 8], strides = [1, 1, 1]} : vector<18x16x8xf32> to vector<16x16x8xf32>
    %109 = vector.extract_strided_slice %94 {offsets = [0, 0, 0], sizes = [1, 1, 8], strides = [1, 1, 1]} : vector<3x3x8xf32> to vector<1x1x8xf32>
    %110 = vector.shape_cast %109 : vector<1x1x8xf32> to vector<8xf32>
    %111 = vector.shape_cast %110 : vector<8xf32> to vector<1x1x8xf32>
    %112 = vector.broadcast %111 : vector<1x1x8xf32> to vector<16x16x8xf32>
    %113 = arith.mulf %108, %112 : vector<16x16x8xf32>
    %114 = arith.addf %107, %113 : vector<16x16x8xf32>
    %115 = vector.extract_strided_slice %96 {offsets = [0, 0, 0], sizes = [16, 16, 8], strides = [1, 1, 1]} : vector<18x16x8xf32> to vector<16x16x8xf32>
    %116 = vector.extract_strided_slice %94 {offsets = [0, 1, 0], sizes = [1, 1, 8], strides = [1, 1, 1]} : vector<3x3x8xf32> to vector<1x1x8xf32>
    %117 = vector.shape_cast %116 : vector<1x1x8xf32> to vector<8xf32>
    %118 = vector.shape_cast %117 : vector<8xf32> to vector<1x1x8xf32>
    %119 = vector.broadcast %118 : vector<1x1x8xf32> to vector<16x16x8xf32>
    %120 = arith.mulf %115, %119 : vector<16x16x8xf32>
    %121 = arith.addf %114, %120 : vector<16x16x8xf32>
    %122 = vector.extract_strided_slice %101 {offsets = [0, 0, 0], sizes = [16, 16, 8], strides = [1, 1, 1]} : vector<18x16x8xf32> to vector<16x16x8xf32>
    %123 = vector.extract_strided_slice %94 {offsets = [0, 2, 0], sizes = [1, 1, 8], strides = [1, 1, 1]} : vector<3x3x8xf32> to vector<1x1x8xf32>
    %124 = vector.shape_cast %123 : vector<1x1x8xf32> to vector<8xf32>
    %125 = vector.shape_cast %124 : vector<8xf32> to vector<1x1x8xf32>
    %126 = vector.broadcast %125 : vector<1x1x8xf32> to vector<16x16x8xf32>
    %127 = arith.mulf %122, %126 : vector<16x16x8xf32>
    %128 = arith.addf %121, %127 : vector<16x16x8xf32>
    %129 = vector.extract_strided_slice %99 {offsets = [1, 0, 0], sizes = [16, 16, 8], strides = [1, 1, 1]} : vector<18x16x8xf32> to vector<16x16x8xf32>
    %130 = vector.extract_strided_slice %94 {offsets = [1, 0, 0], sizes = [1, 1, 8], strides = [1, 1, 1]} : vector<3x3x8xf32> to vector<1x1x8xf32>
    %131 = vector.shape_cast %130 : vector<1x1x8xf32> to vector<8xf32>
    %132 = vector.shape_cast %131 : vector<8xf32> to vector<1x1x8xf32>
    %133 = vector.broadcast %132 : vector<1x1x8xf32> to vector<16x16x8xf32>
    %134 = arith.mulf %129, %133 : vector<16x16x8xf32>
    %135 = arith.addf %128, %134 : vector<16x16x8xf32>
    %136 = vector.extract_strided_slice %101 {offsets = [1, 0, 0], sizes = [16, 16, 8], strides = [1, 1, 1]} : vector<18x16x8xf32> to vector<16x16x8xf32>
    %137 = vector.extract_strided_slice %94 {offsets = [1, 2, 0], sizes = [1, 1, 8], strides = [1, 1, 1]} : vector<3x3x8xf32> to vector<1x1x8xf32>
    %138 = vector.shape_cast %137 : vector<1x1x8xf32> to vector<8xf32>
    %139 = vector.shape_cast %138 : vector<8xf32> to vector<1x1x8xf32>
    %140 = vector.broadcast %139 : vector<1x1x8xf32> to vector<16x16x8xf32>
    %141 = arith.mulf %136, %140 : vector<16x16x8xf32>
    %142 = arith.addf %135, %141 : vector<16x16x8xf32>
    %143 = vector.extract_strided_slice %99 {offsets = [2, 0, 0], sizes = [16, 16, 8], strides = [1, 1, 1]} : vector<18x16x8xf32> to vector<16x16x8xf32>
    %144 = vector.extract_strided_slice %94 {offsets = [2, 0, 0], sizes = [1, 1, 8], strides = [1, 1, 1]} : vector<3x3x8xf32> to vector<1x1x8xf32>
    %145 = vector.shape_cast %144 : vector<1x1x8xf32> to vector<8xf32>
    %146 = vector.shape_cast %145 : vector<8xf32> to vector<1x1x8xf32>
    %147 = vector.broadcast %146 : vector<1x1x8xf32> to vector<16x16x8xf32>
    %148 = arith.mulf %143, %147 : vector<16x16x8xf32>
    %149 = arith.addf %142, %148 : vector<16x16x8xf32>
    %150 = vector.extract_strided_slice %96 {offsets = [2, 0, 0], sizes = [16, 16, 8], strides = [1, 1, 1]} : vector<18x16x8xf32> to vector<16x16x8xf32>
    %151 = vector.extract_strided_slice %94 {offsets = [2, 1, 0], sizes = [1, 1, 8], strides = [1, 1, 1]} : vector<3x3x8xf32> to vector<1x1x8xf32>
    %152 = vector.shape_cast %151 : vector<1x1x8xf32> to vector<8xf32>
    %153 = vector.shape_cast %152 : vector<8xf32> to vector<1x1x8xf32>
    %154 = vector.broadcast %153 : vector<1x1x8xf32> to vector<16x16x8xf32>
    %155 = arith.mulf %150, %154 : vector<16x16x8xf32>
    %156 = arith.addf %149, %155 : vector<16x16x8xf32>
    %157 = vector.extract_strided_slice %101 {offsets = [2, 0, 0], sizes = [16, 16, 8], strides = [1, 1, 1]} : vector<18x16x8xf32> to vector<16x16x8xf32>
    %158 = vector.extract_strided_slice %94 {offsets = [2, 2, 0], sizes = [1, 1, 8], strides = [1, 1, 1]} : vector<3x3x8xf32> to vector<1x1x8xf32>
    %159 = vector.shape_cast %158 : vector<1x1x8xf32> to vector<8xf32>
    %160 = vector.shape_cast %159 : vector<8xf32> to vector<1x1x8xf32>
    %161 = vector.broadcast %160 : vector<1x1x8xf32> to vector<16x16x8xf32>
    %162 = arith.mulf %157, %161 : vector<16x16x8xf32>
    %163 = arith.addf %156, %162 : vector<16x16x8xf32>
    %c0_23 = arith.constant 0 : index
    %c0_24 = arith.constant 0 : index
    %164 = vector.load %arg7[%c0_23, %c0_24] : memref<1x8xf32, #tpu.memory_space<vmem>>, vector<1x8xf32>
    %165 = vector.shape_cast %164 : vector<1x8xf32> to vector<8xf32>
    %166 = vector.shape_cast %165 : vector<8xf32> to vector<1x1x8xf32>
    %167 = vector.broadcast %166 : vector<1x1x8xf32> to vector<16x16x8xf32>
    %168 = arith.addf %163, %167 : vector<16x16x8xf32>
    %169 = arith.addf %168, %1 : vector<16x16x8xf32>
    %c0_25 = arith.constant 0 : index
    %c0_26 = arith.constant 0 : index
    %c0_27 = arith.constant 0 : index
    %c0_28 = arith.constant 0 : index
    %170 = vector.load %arg8[%c0_25, %c0_26, %c0_27, %c0_28] : memref<1x16x16x8xf32, #tpu.memory_space<vmem>>, vector<1x16x16x8xf32>
    %171 = vector.shape_cast %170 : vector<1x16x16x8xf32> to vector<16x16x8xf32>
    %172 = vector.shape_cast %169 : vector<16x16x8xf32> to vector<1x16x16x8xf32>
    tpu.vector_store %arg8[%c0_25, %c0_26, %c0_27, %c0_28], %172 {strides = array<i32>} : memref<1x16x16x8xf32, #tpu.memory_space<vmem>>, vector<1x16x16x8xf32>,
    return
  }
  func.func @transform_0(%arg0: i32) -> (i32, i32, i32, i32) {
    %c0_i32 = arith.constant 0 : i32
    %c0_i32_0 = arith.constant 0 : i32
    %c0_i32_1 = arith.constant 0 : i32
    %c0_i32_2 = arith.constant 0 : i32
    return %arg0, %c0_i32, %c0_i32_0, %c0_i32_1 : i32, i32, i32, i32
  }
  func.func @transform_1(%arg0: i32) -> (i32, i32, i32) {
    %c0_i32 = arith.constant 0 : i32
    %c0_i32_0 = arith.constant 0 : i32
    %c0_i32_1 = arith.constant 0 : i32
    %c0_i32_2 = arith.constant 0 : i32
    return %c0_i32, %c0_i32_0, %c0_i32_1 : i32, i32, i32
  }
  func.func @transform_2(%arg0: i32) -> (i32, i32) {
    %c0_i32 = arith.constant 0 : i32
    %c0_i32_0 = arith.constant 0 : i32
    %c0_i32_1 = arith.constant 0 : i32
    return %c0_i32, %c0_i32_0 : i32, i32
  }
  func.func @transform_3(%arg0: i32) -> (i32, i32) {
    %c0_i32 = arith.constant 0 : i32
    %c0_i32_0 = arith.constant 0 : i32
    %c0_i32_1 = arith.constant 0 : i32
    return %c0_i32, %c0_i32_0 : i32, i32
  }
  func.func @transform_4(%arg0: i32) -> (i32, i32) {
    %c0_i32 = arith.constant 0 : i32
    %c0_i32_0 = arith.constant 0 : i32
    %c0_i32_1 = arith.constant 0 : i32
    return %c0_i32, %c0_i32_0 : i32, i32
  }
  func.func @transform_5(%arg0: i32) -> (i32, i32, i32) {
    %c0_i32 = arith.constant 0 : i32
    %c0_i32_0 = arith.constant 0 : i32
    %c0_i32_1 = arith.constant 0 : i32
    %c0_i32_2 = arith.constant 0 : i32
    return %c0_i32, %c0_i32_0, %c0_i32_1 : i32, i32, i32
  }
  func.func @transform_6(%arg0: i32) -> (i32, i32) {
    %c0_i32 = arith.constant 0 : i32
    %c0_i32_0 = arith.constant 0 : i32
    %c0_i32_1 = arith.constant 0 : i32
    return %c0_i32, %c0_i32_0 : i32, i32
  }
  func.func @transform_7(%arg0: i32) -> (i32, i32, i32, i32) {
    %c0_i32 = arith.constant 0 : i32
    %c0_i32_0 = arith.constant 0 : i32
    %c0_i32_1 = arith.constant 0 : i32
    %c0_i32_2 = arith.constant 0 : i32
    return %arg0, %c0_i32, %c0_i32_0, %c0_i32_1 : i32, i32, i32, i32
  }
}

</mosaic_0001>

<llo_original>
// kernel: tpu_custom_call.1
$region0: #{tpu_custom_call.1}
  #allocation0 [shape = 'u32[]', space=smem, size = 0x4, offset = 0x4, fixed_abs, tag = 'smem constant byte address 0x4 - core index']
  #allocation1 [shape = 'u32[144,128]{1,0:T(1,128)}', space=vmem, size = 0x12000, scoped, tag = 'internal scratch']
  %s0 = inlined_call_operand.vmem [shape: f32[2,16,16,8], index: 0, kind: input, shape index: {}]
  %s1 = inlined_call_operand.vmem [shape: f32[3,3,8], index: 1, kind: input, shape index: {}]
  %s2 = inlined_call_operand.vmem [shape: f32[1,8], index: 2, kind: input, shape index: {}]
  %s3 = inlined_call_operand.vmem [shape: f32[8,8], index: 3, kind: input, shape index: {}]
  %s4 = inlined_call_operand.vmem [shape: f32[1,8], index: 4, kind: input, shape index: {}]
  %s5 = inlined_call_operand.vmem [shape: f32[3,3,8], index: 5, kind: input, shape index: {}]
  %s6 = inlined_call_operand.vmem [shape: f32[1,8], index: 6, kind: input, shape index: {}]
  %s7 = inlined_call_operand.vmem [shape: f32[2,16,16,8], index: 7, kind: output, shape index: {}]
  %s8 = sld [smem:[#allocation0]]
  $region61: #{tpu_custom_call.1} parent=0
    _
  %s10 = ssub.s32 1, %s8
  %s11 = scalar_select 0, %s10, %s8
  loop: start=0, step=1, limit=4
  $region2: #{tpu_custom_call.1} parent=0 // loop_pre_header
    _
  $region3: #{tpu_custom_call.1} parent=0 // loop_header
    %s13 = sphi 0, %s17
    %p14 = scmp.ge.s32.totalorder %s13, 4
    %s23 = sphi 0, %s25
    %s26 = sphi 0, %s23
    %s27 = sphi 0, %s26
    %s43 = sphi 0, %s27
    %s47 = sphi 0, %s47
    %s49 = sphi 0, %s47
    %s50 = sphi 0, %s49
    %s64 = sphi 0, %s50
    %s68 = sphi 0, %s68
    %s70 = sphi 0, %s68
    %s71 = sphi 0, %s70
    %s85 = sphi 0, %s71
    %s89 = sphi 0, %s89
    %s91 = sphi 0, %s89
    %s92 = sphi 0, %s91
    %s106 = sphi 0, %s92
    %s110 = sphi 0, %s110
    %s112 = sphi 0, %s110
    %s113 = sphi 0, %s112
    %s127 = sphi 0, %s113
    %s131 = sphi 0, %s131
    %s133 = sphi 0, %s131
    %s134 = sphi 0, %s133
    %s148 = sphi 0, %s134
    %s152 = sphi 0, %s152
    %s154 = sphi 0, %s152
    %s155 = sphi 0, %s154
    %s169 = sphi 0, %s155
    %s175 = sphi 0, %s177
    %s178 = sphi 0, %s175
    %s179 = sphi 0, %s178
    %s195 = sphi 0, %s179
  $region4: #{tpu_custom_call.1} parent=0 // loop_header_branch
    %16 = sbr.rel (%p14) target = $region8
  $region5: #{tpu_custom_call.1} parent=0 // loop_body
    %s18 = ssub.s32 %s13, 1
    %s19 = ssub.s32 %s13, 2
    %s20 = sadd.s32 %s13, 1
    %s21 = ssub.s32 %s13, %s20
    %p22 = scmp.eq.s32.totalorder %s21, 0
    %s24 = sadd.s32 %s23, 1
    %s25 = scalar_select %p22, %s23, %s24
    %p28 = pneg %p22
    %p29 = scmp.eq.s32.totalorder %s13, 1
    %p30 = por %p28, %p29
    %p31 = scmp.ne.s32.totalorder %s23, %s26
    %p32 = scmp.eq.s32.totalorder %s13, 0
    %p33 = por %p31, %p32
    %p34 = scmp.ne.s32.totalorder %s23, %s26
    %p35 = scmp.eq.s32.totalorder %s18, 1
    %p36 = por %p34, %p35
    %p37 = scmp.ne.s32.totalorder %s26, %s27
    %p38 = scmp.eq.s32.totalorder %s18, 0
    %p39 = por %p37, %p38
    %p40 = scmp.ne.s32.totalorder %s26, %s27
    %p41 = scmp.eq.s32.totalorder %s19, 1
    %p42 = por %p40, %p41
    %p44 = scmp.ne.s32.totalorder %s27, %s43
    %p45 = scmp.eq.s32.totalorder %s19, 0
    %p46 = por %p44, %p45
    %s48 = sadd.s32 %s47, 1
    %p51 = scmp.eq.s32.totalorder %s13, 1
    %p52 = scmp.ne.s32.totalorder %s47, %s49
    %p53 = scmp.eq.s32.totalorder %s13, 0
    %p54 = por %p52, %p53
    %p55 = scmp.ne.s32.totalorder %s47, %s49
    %p56 = scmp.eq.s32.totalorder %s18, 1
    %p57 = por %p55, %p56
    %p58 = scmp.ne.s32.totalorder %s49, %s50
    %p59 = scmp.eq.s32.totalorder %s18, 0
    %p60 = por %p58, %p59
    %p61 = scmp.ne.s32.totalorder %s49, %s50
    %p62 = scmp.eq.s32.totalorder %s19, 1
    %p63 = por %p61, %p62
    %p65 = scmp.ne.s32.totalorder %s50, %s64
    %p66 = scmp.eq.s32.totalorder %s19, 0
    %p67 = por %p65, %p66
    %s69 = sadd.s32 %s68, 1
    %p72 = scmp.eq.s32.totalorder %s13, 1
    %p73 = scmp.ne.s32.totalorder %s68, %s70
    %p74 = scmp.eq.s32.totalorder %s13, 0
    %p75 = por %p73, %p74
    %p76 = scmp.ne.s32.totalorder %s68, %s70
    %p77 = scmp.eq.s32.totalorder %s18, 1
    %p78 = por %p76, %p77
    %p79 = scmp.ne.s32.totalorder %s70, %s71
    %p80 = scmp.eq.s32.totalorder %s18, 0
    %p81 = por %p79, %p80
    %p82 = scmp.ne.s32.totalorder %s70, %s71
    %p83 = scmp.eq.s32.totalorder %s19, 1
    %p84 = por %p82, %p83
    %p86 = scmp.ne.s32.totalorder %s71, %s85
    %p87 = scmp.eq.s32.totalorder %s19, 0
    %p88 = por %p86, %p87
    %s90 = sadd.s32 %s89, 1
    %p93 = scmp.eq.s32.totalorder %s13, 1
    %p94 = scmp.ne.s32.totalorder %s89, %s91
    %p95 = scmp.eq.s32.totalorder %s13, 0
    %p96 = por %p94, %p95
    %p97 = scmp.ne.s32.totalorder %s89, %s91
    %p98 = scmp.eq.s32.totalorder %s18, 1
    %p99 = por %p97, %p98
    %p100 = scmp.ne.s32.totalorder %s91, %s92
    %p101 = scmp.eq.s32.totalorder %s18, 0
    %p102 = por %p100, %p101
    %p103 = scmp.ne.s32.totalorder %s91, %s92
    %p104 = scmp.eq.s32.totalorder %s19, 1
    %p105 = por %p103, %p104
    %p107 = scmp.ne.s32.totalorder %s92, %s106
    %p108 = scmp.eq.s32.totalorder %s19, 0
    %p109 = por %p107, %p108
    %s111 = sadd.s32 %s110, 1
    %p114 = scmp.eq.s32.totalorder %s13, 1
    %p115 = scmp.ne.s32.totalorder %s110, %s112
    %p116 = scmp.eq.s32.totalorder %s13, 0
    %p117 = por %p115, %p116
    %p118 = scmp.ne.s32.totalorder %s110, %s112
    %p119 = scmp.eq.s32.totalorder %s18, 1
    %p120 = por %p118, %p119
    %p121 = scmp.ne.s32.totalorder %s112, %s113
    %p122 = scmp.eq.s32.totalorder %s18, 0
    %p123 = por %p121, %p122
    %p124 = scmp.ne.s32.totalorder %s112, %s113
    %p125 = scmp.eq.s32.totalorder %s19, 1
    %p126 = por %p124, %p125
    %p128 = scmp.ne.s32.totalorder %s113, %s127
    %p129 = scmp.eq.s32.totalorder %s19, 0
    %p130 = por %p128, %p129
    %s132 = sadd.s32 %s131, 1
    %p135 = scmp.eq.s32.totalorder %s13, 1
    %p136 = scmp.ne.s32.totalorder %s131, %s133
    %p137 = scmp.eq.s32.totalorder %s13, 0
    %p138 = por %p136, %p137
    %p139 = scmp.ne.s32.totalorder %s131, %s133
    %p140 = scmp.eq.s32.totalorder %s18, 1
    %p141 = por %p139, %p140
    %p142 = scmp.ne.s32.totalorder %s133, %s134
    %p143 = scmp.eq.s32.totalorder %s18, 0
    %p144 = por %p142, %p143
    %p145 = scmp.ne.s32.totalorder %s133, %s134
    %p146 = scmp.eq.s32.totalorder %s19, 1
    %p147 = por %p145, %p146
    %p149 = scmp.ne.s32.totalorder %s134, %s148
    %p150 = scmp.eq.s32.totalorder %s19, 0
    %p151 = por %p149, %p150
    %s153 = sadd.s32 %s152, 1
    %p156 = scmp.eq.s32.totalorder %s13, 1
    %p157 = scmp.ne.s32.totalorder %s152, %s154
    %p158 = scmp.eq.s32.totalorder %s13, 0
    %p159 = por %p157, %p158
    %p160 = scmp.ne.s32.totalorder %s152, %s154
    %p161 = scmp.eq.s32.totalorder %s18, 1
    %p162 = por %p160, %p161
    %p163 = scmp.ne.s32.totalorder %s154, %s155
    %p164 = scmp.eq.s32.totalorder %s18, 0
    %p165 = por %p163, %p164
    %p166 = scmp.ne.s32.totalorder %s154, %s155
    %p167 = scmp.eq.s32.totalorder %s19, 1
    %p168 = por %p166, %p167
    %p170 = scmp.ne.s32.totalorder %s155, %s169
    %p171 = scmp.eq.s32.totalorder %s19, 0
    %p172 = por %p170, %p171
    %s173 = ssub.s32 %s13, %s20
    %p174 = scmp.eq.s32.totalorder %s173, 0
    %s176 = sadd.s32 %s175, 1
    %s177 = scalar_select %p174, %s175, %s176
    %p180 = pneg %p174
    %p181 = scmp.eq.s32.totalorder %s13, 1
    %p182 = por %p180, %p181
    %p183 = scmp.ne.s32.totalorder %s175, %s178
    %p184 = scmp.eq.s32.totalorder %s13, 0
    %p185 = por %p183, %p184
    %p186 = scmp.ne.s32.totalorder %s175, %s178
    %p187 = scmp.eq.s32.totalorder %s18, 1
    %p188 = por %p186, %p187
    %p189 = scmp.ne.s32.totalorder %s178, %s179
    %p190 = scmp.eq.s32.totalorder %s18, 0
    %p191 = por %p189, %p190
    %p192 = scmp.ne.s32.totalorder %s178, %s179
    %p193 = scmp.eq.s32.totalorder %s19, 1
    %p194 = por %p192, %p193
    %p196 = scmp.ne.s32.totalorder %s179, %s195
    %p197 = scmp.eq.s32.totalorder %s19, 0
    %p198 = por %p196, %p197
    %p199 = scmp.le.s32.totalorder 1, %s13
    %p200 = scmp.lt.s32.totalorder %s13, 3
    %p201 = pnand %p199, %p200
    %p202 = pneg %p201
    // Predicated region
    $region9: #{tpu_custom_call.1} parent=5 // pred_check
      _
    $region10: #{tpu_custom_call.1} parent=5 // pred_check_branch
      %204 = sbr.rel (%p201) target = $region12
    $region11: #{tpu_custom_call.1} parent=5 // pred_region
      %s205 = ssub.s32 %s13, 1
      // Predicated region
      $region13: #{tpu_custom_call.1} parent=11 // pred_check
        %p206 = pneg %p60
      $region14: #{tpu_custom_call.1} parent=11 // pred_check_branch
        %208 = sbr.rel (%p206) target = $region16
      $region15: #{tpu_custom_call.1} parent=11 // pred_region
        _
      $region16: #{tpu_custom_call.1} parent=11 // pred_fallthru
        _
      // Predicated region
      $region17: #{tpu_custom_call.1} parent=11 // pred_check
        %p209 = pneg %p81
      $region18: #{tpu_custom_call.1} parent=11 // pred_check_branch
        %211 = sbr.rel (%p209) target = $region20
      $region19: #{tpu_custom_call.1} parent=11 // pred_region
        _
      $region20: #{tpu_custom_call.1} parent=11 // pred_fallthru
        _
      // Predicated region
      $region21: #{tpu_custom_call.1} parent=11 // pred_check
        %p212 = pneg %p102
      $region22: #{tpu_custom_call.1} parent=11 // pred_check_branch
        %214 = sbr.rel (%p212) target = $region24
      $region23: #{tpu_custom_call.1} parent=11 // pred_region
        _
      $region24: #{tpu_custom_call.1} parent=11 // pred_fallthru
        _
      // Predicated region
      $region25: #{tpu_custom_call.1} parent=11 // pred_check
        %p215 = pneg %p123
      $region26: #{tpu_custom_call.1} parent=11 // pred_check_branch
        %217 = sbr.rel (%p215) target = $region28
      $region27: #{tpu_custom_call.1} parent=11 // pred_region
        _
      $region28: #{tpu_custom_call.1} parent=11 // pred_fallthru
        _
      // Predicated region
      $region29: #{tpu_custom_call.1} parent=11 // pred_check
        %p218 = pneg %p144
      $region30: #{tpu_custom_call.1} parent=11 // pred_check_branch
        %220 = sbr.rel (%p218) target = $region32
      $region31: #{tpu_custom_call.1} parent=11 // pred_region
        _
      $region32: #{tpu_custom_call.1} parent=11 // pred_fallthru
        _
      // Predicated region
      $region33: #{tpu_custom_call.1} parent=11 // pred_check
        %p221 = pneg %p165
      $region34: #{tpu_custom_call.1} parent=11 // pred_check_branch
        %223 = sbr.rel (%p221) target = $region36
      $region35: #{tpu_custom_call.1} parent=11 // pred_region
        _
      $region36: #{tpu_custom_call.1} parent=11 // pred_fallthru
        _
    $region12: #{tpu_custom_call.1} parent=5 // pred_fallthru
      _
    %p224 = scmp.lt.s32.totalorder %s13, 2
    // Predicated region
    $region37: #{tpu_custom_call.1} parent=5 // pred_check
      %p225 = pneg %p224
    $region38: #{tpu_custom_call.1} parent=5 // pred_check_branch
      %227 = sbr.rel (%p225) target = $region40
    $region39: #{tpu_custom_call.1} parent=5 // pred_region
      // Predicated region
      $region41: #{tpu_custom_call.1} parent=39 // pred_check
        %p228 = pneg %p33
      $region42: #{tpu_custom_call.1} parent=39 // pred_check_branch
        %230 = sbr.rel (%p228) target = $region44
      $region43: #{tpu_custom_call.1} parent=39 // pred_region
        %p231 = scmp.lt.s32.totalorder %s13, 1
        %s232 = scalar_select %p231, %s13, 1
        %s233 = smul.addr %s232, 32
        %s234 = smul.addr %s233, 8
        %s235 = scalar_lea.vmem %s0, %s234
      $region44: #{tpu_custom_call.1} parent=39 // pred_fallthru
        _
    $region40: #{tpu_custom_call.1} parent=5 // pred_fallthru
      _
    %p236 = scmp.le.s32.totalorder 1, %s13
    %p237 = scmp.lt.s32.totalorder %s13, 3
    %p238 = pnand %p236, %p237
    %p239 = pneg %p238
    // Predicated region
    $region45: #{tpu_custom_call.1} parent=5 // pred_check
      _
    $region46: #{tpu_custom_call.1} parent=5 // pred_check_branch
      %241 = sbr.rel (%p238) target = $region48
    $region47: #{tpu_custom_call.1} parent=5 // pred_region
      %s242 = ssub.s32 %s13, 1
      %p243 = scmp.lt.s32.totalorder %s18, 1
      %s244 = scalar_select %p243, %s18, 1
      %s245 = smul.addr %s244, 32
      %s246 = smul.addr %s245, 8
      %s247 = scalar_lea.vmem %s0, %s246
      %p248 = pneg %p39
      %p249 = pneg %p36
      %p250 = pneg %p60
      %p251 = pneg %p57
      %p252 = pneg %p81
      %p253 = pneg %p78
      %p254 = pneg %p102
      %p255 = pneg %p99
      %p256 = pneg %p123
      %p257 = pneg %p120
      %p258 = pneg %p144
      %p259 = pneg %p141
      %p260 = pneg %p165
      %p261 = pneg %p162
      %p262 = pneg %p191
      %p263 = pneg %p188
      %p264 = scmp.lt.s32.totalorder %s18, 1
      %s265 = scalar_select %p264, %s18, 1
      %s266 = smul.addr %s265, 32
      %s267 = smul.addr %s266, 8
      %s268 = scalar_lea.vmem %s7, %s267
      %p269 = scmp.lt.s32.totalorder %s18, 1
      %s270 = scalar_select %p269, %s18, 1
      %s271 = smul.addr %s270, 32
      %s272 = smul.addr %s271, 8
      %s273 = scalar_lea.vmem %s0, %s272
      %p274 = scmp.lt.s32.totalorder %s18, 1
      %s275 = scalar_select %p274, %s18, 1
      %s276 = smul.addr %s275, 32
      %s277 = smul.addr %s276, 8
      %s278 = scalar_lea.vmem %s7, %s277
      %v279 = vld [vmem:[%s273] sm:$0xff]
      %v280 = vld [vmem:[%s273 + $0x8] sm:$0xff]
      %v281 = vld [vmem:[%s273 + $0x10] sm:$0xff]
      %v282 = vld [vmem:[%s273 + $0x18] sm:$0xff]
      %v283 = vld [vmem:[%s273 + $0x20] sm:$0xff]
      %v284 = vld [vmem:[%s273 + $0x28] sm:$0xff]
      %v285 = vld [vmem:[%s273 + $0x30] sm:$0xff]
      %v286 = vld [vmem:[%s273 + $0x38] sm:$0xff]
      %v287 = vld [vmem:[%s273 + $0x40] sm:$0xff]
      %v288 = vld [vmem:[%s273 + $0x48] sm:$0xff]
      %v289 = vld [vmem:[%s273 + $0x50] sm:$0xff]
      %v290 = vld [vmem:[%s273 + $0x58] sm:$0xff]
      %v291 = vld [vmem:[%s273 + $0x60] sm:$0xff]
      %v292 = vld [vmem:[%s273 + $0x68] sm:$0xff]
      %v293 = vld [vmem:[%s273 + $0x70] sm:$0xff]
      %v294 = vld [vmem:[%s273 + $0x78] sm:$0xff]
      %v295 = vld [vmem:[%s273 + $0x80] sm:$0xff]
      %v296 = vld [vmem:[%s273 + $0x88] sm:$0xff]
      %v297 = vld [vmem:[%s273 + $0x90] sm:$0xff]
      %v298 = vld [vmem:[%s273 + $0x98] sm:$0xff]
      %v299 = vld [vmem:[%s273 + $0xa0] sm:$0xff]
      %v300 = vld [vmem:[%s273 + $0xa8] sm:$0xff]
      %v301 = vld [vmem:[%s273 + $0xb0] sm:$0xff]
      %v302 = vld [vmem:[%s273 + $0xb8] sm:$0xff]
      %v303 = vld [vmem:[%s273 + $0xc0] sm:$0xff]
      %v304 = vld [vmem:[%s273 + $0xc8] sm:$0xff]
      %v305 = vld [vmem:[%s273 + $0xd0] sm:$0xff]
      %v306 = vld [vmem:[%s273 + $0xd8] sm:$0xff]
      %v307 = vld [vmem:[%s273 + $0xe0] sm:$0xff]
      %v308 = vld [vmem:[%s273 + $0xe8] sm:$0xff]
      %v309 = vld [vmem:[%s273 + $0xf0] sm:$0xff]
      %v310 = vld [vmem:[%s273 + $0xf8] sm:$0xff]
      %v311 = vld [vmem:[%s1] sm:$0x7]
      %v312 = vld [vmem:[%s1 + $0x4] sm:$0x7]
      %v313 = vld [vmem:[%s1 + $0x8] sm:$0x7]
      %vm347 = vcmask 1040384
      %v348 = vrot.slane 0.0, 7
      %v349 = vsel %vm347, %v348, %v348
      %v350 = vrot.slane %v279, 7
      %v351 = vrot.slane %v280, 7
      %v352 = vsel %vm347, %v350, %v351
      %v353 = vrot.slane %v281, 7
      %v354 = vrot.slane %v282, 7
      %v355 = vsel %vm347, %v353, %v354
      %v356 = vrot.slane %v283, 7
      %v357 = vrot.slane %v284, 7
      %v358 = vsel %vm347, %v356, %v357
      %v359 = vrot.slane %v285, 7
      %v360 = vrot.slane %v286, 7
      %v361 = vsel %vm347, %v359, %v360
      %v362 = vrot.slane %v287, 7
      %v363 = vrot.slane %v288, 7
      %v364 = vsel %vm347, %v362, %v363
      %v365 = vrot.slane %v289, 7
      %v366 = vrot.slane %v290, 7
      %v367 = vsel %vm347, %v365, %v366
      %v368 = vrot.slane %v291, 7
      %v369 = vrot.slane %v292, 7
      %v370 = vsel %vm347, %v368, %v369
      %v371 = vrot.slane %v293, 7
      %v372 = vrot.slane %v294, 7
      %v373 = vsel %vm347, %v371, %v372
      %v374 = vrot.slane %v295, 7
      %v375 = vrot.slane %v296, 7
      %v376 = vsel %vm347, %v374, %v375
      %v377 = vrot.slane %v297, 7
      %v378 = vrot.slane %v298, 7
      %v379 = vsel %vm347, %v377, %v378
      %v380 = vrot.slane %v299, 7
      %v381 = vrot.slane %v300, 7
      %v382 = vsel %vm347, %v380, %v381
      %v383 = vrot.slane %v301, 7
      %v384 = vrot.slane %v302, 7
      %v385 = vsel %vm347, %v383, %v384
      %v386 = vrot.slane %v303, 7
      %v387 = vrot.slane %v304, 7
      %v388 = vsel %vm347, %v386, %v387
      %v389 = vrot.slane %v305, 7
      %v390 = vrot.slane %v306, 7
      %v391 = vsel %vm347, %v389, %v390
      %v392 = vrot.slane %v307, 7
      %v393 = vrot.slane %v308, 7
      %v394 = vsel %vm347, %v392, %v393
      %v395 = vrot.slane %v309, 7
      %v396 = vrot.slane %v310, 7
      %v397 = vsel %vm347, %v395, %v396
      %v432 = vsel %vm347, 0.0, %v348
      %v433 = vsel %vm347, 0.0, %v350
      %v434 = vsel %vm347, 0.0, %v353
      %v435 = vsel %vm347, 0.0, %v356
      %v436 = vsel %vm347, 0.0, %v359
      %v437 = vsel %vm347, 0.0, %v362
      %v438 = vsel %vm347, 0.0, %v365
      %v439 = vsel %vm347, 0.0, %v368
      %v440 = vsel %vm347, 0.0, %v371
      %v441 = vsel %vm347, 0.0, %v374
      %v442 = vsel %vm347, 0.0, %v377
      %v443 = vsel %vm347, 0.0, %v380
      %v444 = vsel %vm347, 0.0, %v383
      %v445 = vsel %vm347, 0.0, %v386
      %v446 = vsel %vm347, 0.0, %v389
      %v447 = vsel %vm347, 0.0, %v392
      %v448 = vsel %vm347, 0.0, %v395
      %vm449 = vcmask 1046528
      %v450 = vrot.slane 0.0, 1
      %v451 = vsel %vm449, %v450, %v450
      %v452 = vrot.slane %v279, 1
      %v453 = vrot.slane %v280, 1
      %v454 = vsel %vm449, %v452, %v453
      %v455 = vrot.slane %v281, 1
      %v456 = vrot.slane %v282, 1
      %v457 = vsel %vm449, %v455, %v456
      %v458 = vrot.slane %v283, 1
      %v459 = vrot.slane %v284, 1
      %v460 = vsel %vm449, %v458, %v459
      %v461 = vrot.slane %v285, 1
      %v462 = vrot.slane %v286, 1
      %v463 = vsel %vm449, %v461, %v462
      %v464 = vrot.slane %v287, 1
      %v465 = vrot.slane %v288, 1
      %v466 = vsel %vm449, %v464, %v465
      %v467 = vrot.slane %v289, 1
      %v468 = vrot.slane %v290, 1
      %v469 = vsel %vm449, %v467, %v468
      %v470 = vrot.slane %v291, 1
      %v471 = vrot.slane %v292, 1
      %v472 = vsel %vm449, %v470, %v471
      %v473 = vrot.slane %v293, 1
      %v474 = vrot.slane %v294, 1
      %v475 = vsel %vm449, %v473, %v474
      %v476 = vrot.slane %v295, 1
      %v477 = vrot.slane %v296, 1
      %v478 = vsel %vm449, %v476, %v477
      %v479 = vrot.slane %v297, 1
      %v480 = vrot.slane %v298, 1
      %v481 = vsel %vm449, %v479, %v480
      %v482 = vrot.slane %v299, 1
      %v483 = vrot.slane %v300, 1
      %v484 = vsel %vm449, %v482, %v483
      %v485 = vrot.slane %v301, 1
      %v486 = vrot.slane %v302, 1
      %v487 = vsel %vm449, %v485, %v486
      %v488 = vrot.slane %v303, 1
      %v489 = vrot.slane %v304, 1
      %v490 = vsel %vm449, %v488, %v489
      %v491 = vrot.slane %v305, 1
      %v492 = vrot.slane %v306, 1
      %v493 = vsel %vm449, %v491, %v492
      %v494 = vrot.slane %v307, 1
      %v495 = vrot.slane %v308, 1
      %v496 = vsel %vm449, %v494, %v495
      %v497 = vrot.slane %v309, 1
      %v498 = vrot.slane %v310, 1
      %v499 = vsel %vm449, %v497, %v498
      %v534 = vsel %vm449, %v450, 0.0
      %v535 = vsel %vm449, %v453, 0.0
      %v536 = vsel %vm449, %v456, 0.0
      %v537 = vsel %vm449, %v459, 0.0
      %v538 = vsel %vm449, %v462, 0.0
      %v539 = vsel %vm449, %v465, 0.0
      %v540 = vsel %vm449, %v468, 0.0
      %v541 = vsel %vm449, %v471, 0.0
      %v542 = vsel %vm449, %v474, 0.0
      %v543 = vsel %vm449, %v477, 0.0
      %v544 = vsel %vm449, %v480, 0.0
      %v545 = vsel %vm449, %v483, 0.0
      %v546 = vsel %vm449, %v486, 0.0
      %v547 = vsel %vm449, %v489, 0.0
      %v548 = vsel %vm449, %v492, 0.0
      %v549 = vsel %vm449, %v495, 0.0
      %v550 = vsel %vm449, %v498, 0.0
      %v551 = vlaneseq
      %v552 = vshrl.u32 %v551, 7
      %v553 = vsub.s32 1, %v552
      %v554 = vrot.slane %v312, %v553
      %v555 = vmul.f32 %v279, %v554
      %v556 = vmul.f32 %v280, %v554
      %v557 = vmul.f32 %v281, %v554
      %v558 = vmul.f32 %v282, %v554
      %v559 = vmul.f32 %v283, %v554
      %v560 = vmul.f32 %v284, %v554
      %v561 = vmul.f32 %v285, %v554
      %v562 = vmul.f32 %v286, %v554
      %v563 = vmul.f32 %v287, %v554
      %v564 = vmul.f32 %v288, %v554
      %v565 = vmul.f32 %v289, %v554
      %v566 = vmul.f32 %v290, %v554
      %v567 = vmul.f32 %v291, %v554
      %v568 = vmul.f32 %v292, %v554
      %v569 = vmul.f32 %v293, %v554
      %v570 = vmul.f32 %v294, %v554
      %v571 = vmul.f32 %v295, %v554
      %v572 = vmul.f32 %v296, %v554
      %v573 = vmul.f32 %v297, %v554
      %v574 = vmul.f32 %v298, %v554
      %v575 = vmul.f32 %v299, %v554
      %v576 = vmul.f32 %v300, %v554
      %v577 = vmul.f32 %v301, %v554
      %v578 = vmul.f32 %v302, %v554
      %v579 = vmul.f32 %v303, %v554
      %v580 = vmul.f32 %v304, %v554
      %v581 = vmul.f32 %v305, %v554
      %v582 = vmul.f32 %v306, %v554
      %v583 = vmul.f32 %v307, %v554
      %v584 = vmul.f32 %v308, %v554
      %v585 = vmul.f32 %v309, %v554
      %v586 = vmul.f32 %v310, %v554
      %v587 = vlaneseq
      %v588 = vshrl.u32 %v587, 7
      %v589 = vsub.s32 0, %v588
      %v590 = vrot.slane %v311, %v589
      %v591 = vmul.f32 %v432, %v590
      %v592 = vmul.f32 %v349, %v590
      %v593 = vmul.f32 %v433, %v590
      %v594 = vmul.f32 %v352, %v590
      %v595 = vmul.f32 %v434, %v590
      %v596 = vmul.f32 %v355, %v590
      %v597 = vmul.f32 %v435, %v590
      %v598 = vmul.f32 %v358, %v590
      %v599 = vmul.f32 %v436, %v590
      %v600 = vmul.f32 %v361, %v590
      %v601 = vmul.f32 %v437, %v590
      %v602 = vmul.f32 %v364, %v590
      %v603 = vmul.f32 %v438, %v590
      %v604 = vmul.f32 %v367, %v590
      %v605 = vmul.f32 %v439, %v590
      %v606 = vmul.f32 %v370, %v590
      %v607 = vmul.f32 %v440, %v590
      %v608 = vmul.f32 %v373, %v590
      %v609 = vmul.f32 %v441, %v590
      %v610 = vmul.f32 %v376, %v590
      %v611 = vmul.f32 %v442, %v590
      %v612 = vmul.f32 %v379, %v590
      %v613 = vmul.f32 %v443, %v590
      %v614 = vmul.f32 %v382, %v590
      %v615 = vmul.f32 %v444, %v590
      %v616 = vmul.f32 %v385, %v590
      %v617 = vmul.f32 %v445, %v590
      %v618 = vmul.f32 %v388, %v590
      %v619 = vmul.f32 %v446, %v590
      %v620 = vmul.f32 %v391, %v590
      %v621 = vmul.f32 %v447, %v590
      %v622 = vmul.f32 %v394, %v590
      %v623 = vadd.f32 %v555, %v591
      %v624 = vadd.f32 %v556, %v592
      %v625 = vadd.f32 %v557, %v593
      %v626 = vadd.f32 %v558, %v594
      %v627 = vadd.f32 %v559, %v595
      %v628 = vadd.f32 %v560, %v596
      %v629 = vadd.f32 %v561, %v597
      %v630 = vadd.f32 %v562, %v598
      %v631 = vadd.f32 %v563, %v599
      %v632 = vadd.f32 %v564, %v600
      %v633 = vadd.f32 %v565, %v601
      %v634 = vadd.f32 %v566, %v602
      %v635 = vadd.f32 %v567, %v603
      %v636 = vadd.f32 %v568, %v604
      %v637 = vadd.f32 %v569, %v605
      %v638 = vadd.f32 %v570, %v606
      %v639 = vadd.f32 %v571, %v607
      %v640 = vadd.f32 %v572, %v608
      %v641 = vadd.f32 %v573, %v609
      %v642 = vadd.f32 %v574, %v610
      %v643 = vadd.f32 %v575, %v611
      %v644 = vadd.f32 %v576, %v612
      %v645 = vadd.f32 %v577, %v613
      %v646 = vadd.f32 %v578, %v614
      %v647 = vadd.f32 %v579, %v615
      %v648 = vadd.f32 %v580, %v616
      %v649 = vadd.f32 %v581, %v617
      %v650 = vadd.f32 %v582, %v618
      %v651 = vadd.f32 %v583, %v619
      %v652 = vadd.f32 %v584, %v620
      %v653 = vadd.f32 %v585, %v621
      %v654 = vadd.f32 %v586, %v622
      %v655 = vlaneseq
      %v656 = vshrl.u32 %v655, 7
      %v657 = vsub.s32 1, %v656
      %v658 = vrot.slane %v311, %v657
      %v659 = vmul.f32 %v658, 0.0
      %v660 = vmul.f32 %v279, %v658
      %v661 = vmul.f32 %v280, %v658
      %v662 = vmul.f32 %v281, %v658
      %v663 = vmul.f32 %v282, %v658
      %v664 = vmul.f32 %v283, %v658
      %v665 = vmul.f32 %v284, %v658
      %v666 = vmul.f32 %v285, %v658
      %v667 = vmul.f32 %v286, %v658
      %v668 = vmul.f32 %v287, %v658
      %v669 = vmul.f32 %v288, %v658
      %v670 = vmul.f32 %v289, %v658
      %v671 = vmul.f32 %v290, %v658
      %v672 = vmul.f32 %v291, %v658
      %v673 = vmul.f32 %v292, %v658
      %v674 = vmul.f32 %v293, %v658
      %v675 = vmul.f32 %v294, %v658
      %v676 = vmul.f32 %v295, %v658
      %v677 = vmul.f32 %v296, %v658
      %v678 = vmul.f32 %v297, %v658
      %v679 = vmul.f32 %v298, %v658
      %v680 = vmul.f32 %v299, %v658
      %v681 = vmul.f32 %v300, %v658
      %v682 = vmul.f32 %v301, %v658
      %v683 = vmul.f32 %v302, %v658
      %v684 = vmul.f32 %v303, %v658
      %v685 = vmul.f32 %v304, %v658
      %v686 = vmul.f32 %v305, %v658
      %v687 = vmul.f32 %v306, %v658
      %v688 = vmul.f32 %v307, %v658
      %v689 = vmul.f32 %v308, %v658
      %v690 = vadd.f32 %v623, %v659
      %v691 = vadd.f32 %v624, %v659
      %v692 = vadd.f32 %v625, %v660
      %v693 = vadd.f32 %v626, %v661
      %v694 = vadd.f32 %v627, %v662
      %v695 = vadd.f32 %v628, %v663
      %v696 = vadd.f32 %v629, %v664
      %v697 = vadd.f32 %v630, %v665
      %v698 = vadd.f32 %v631, %v666
      %v699 = vadd.f32 %v632, %v667
      %v700 = vadd.f32 %v633, %v668
      %v701 = vadd.f32 %v634, %v669
      %v702 = vadd.f32 %v635, %v670
      %v703 = vadd.f32 %v636, %v671
      %v704 = vadd.f32 %v637, %v672
      %v705 = vadd.f32 %v638, %v673
      %v706 = vadd.f32 %v639, %v674
      %v707 = vadd.f32 %v640, %v675
      %v708 = vadd.f32 %v641, %v676
      %v709 = vadd.f32 %v642, %v677
      %v710 = vadd.f32 %v643, %v678
      %v711 = vadd.f32 %v644, %v679
      %v712 = vadd.f32 %v645, %v680
      %v713 = vadd.f32 %v646, %v681
      %v714 = vadd.f32 %v647, %v682
      %v715 = vadd.f32 %v648, %v683
      %v716 = vadd.f32 %v649, %v684
      %v717 = vadd.f32 %v650, %v685
      %v718 = vadd.f32 %v651, %v686
      %v719 = vadd.f32 %v652, %v687
      %v720 = vadd.f32 %v653, %v688
      %v721 = vadd.f32 %v654, %v689
      %v722 = vlaneseq
      %v723 = vshrl.u32 %v722, 7
      %v724 = vsub.s32 2, %v723
      %v725 = vrot.slane %v311, %v724
      %v726 = vmul.f32 %v451, %v725
      %v727 = vmul.f32 %v534, %v725
      %v728 = vmul.f32 %v454, %v725
      %v729 = vmul.f32 %v535, %v725
      %v730 = vmul.f32 %v457, %v725
      %v731 = vmul.f32 %v536, %v725
      %v732 = vmul.f32 %v460, %v725
      %v733 = vmul.f32 %v537, %v725
      %v734 = vmul.f32 %v463, %v725
      %v735 = vmul.f32 %v538, %v725
      %v736 = vmul.f32 %v466, %v725
      %v737 = vmul.f32 %v539, %v725
      %v738 = vmul.f32 %v469, %v725
      %v739 = vmul.f32 %v540, %v725
      %v740 = vmul.f32 %v472, %v725
      %v741 = vmul.f32 %v541, %v725
      %v742 = vmul.f32 %v475, %v725
      %v743 = vmul.f32 %v542, %v725
      %v744 = vmul.f32 %v478, %v725
      %v745 = vmul.f32 %v543, %v725
      %v746 = vmul.f32 %v481, %v725
      %v747 = vmul.f32 %v544, %v725
      %v748 = vmul.f32 %v484, %v725
      %v749 = vmul.f32 %v545, %v725
      %v750 = vmul.f32 %v487, %v725
      %v751 = vmul.f32 %v546, %v725
      %v752 = vmul.f32 %v490, %v725
      %v753 = vmul.f32 %v547, %v725
      %v754 = vmul.f32 %v493, %v725
      %v755 = vmul.f32 %v548, %v725
      %v756 = vmul.f32 %v496, %v725
      %v757 = vmul.f32 %v549, %v725
      %v758 = vadd.f32 %v690, %v726
      %v759 = vadd.f32 %v691, %v727
      %v760 = vadd.f32 %v692, %v728
      %v761 = vadd.f32 %v693, %v729
      %v762 = vadd.f32 %v694, %v730
      %v763 = vadd.f32 %v695, %v731
      %v764 = vadd.f32 %v696, %v732
      %v765 = vadd.f32 %v697, %v733
      %v766 = vadd.f32 %v698, %v734
      %v767 = vadd.f32 %v699, %v735
      %v768 = vadd.f32 %v700, %v736
      %v769 = vadd.f32 %v701, %v737
      %v770 = vadd.f32 %v702, %v738
      %v771 = vadd.f32 %v703, %v739
      %v772 = vadd.f32 %v704, %v740
      %v773 = vadd.f32 %v705, %v741
      %v774 = vadd.f32 %v706, %v742
      %v775 = vadd.f32 %v707, %v743
      %v776 = vadd.f32 %v708, %v744
      %v777 = vadd.f32 %v709, %v745
      %v778 = vadd.f32 %v710, %v746
      %v779 = vadd.f32 %v711, %v747
      %v780 = vadd.f32 %v712, %v748
      %v781 = vadd.f32 %v713, %v749
      %v782 = vadd.f32 %v714, %v750
      %v783 = vadd.f32 %v715, %v751
      %v784 = vadd.f32 %v716, %v752
      %v785 = vadd.f32 %v717, %v753
      %v786 = vadd.f32 %v718, %v754
      %v787 = vadd.f32 %v719, %v755
      %v788 = vadd.f32 %v720, %v756
      %v789 = vadd.f32 %v721, %v757
      %v790 = vlaneseq
      %v791 = vshrl.u32 %v790, 7
      %v792 = vsub.s32 0, %v791
      %v793 = vrot.slane %v312, %v792
      %v794 = vmul.f32 %v433, %v793
      %v795 = vmul.f32 %v352, %v793
      %v796 = vmul.f32 %v434, %v793
      %v797 = vmul.f32 %v355, %v793
      %v798 = vmul.f32 %v435, %v793
      %v799 = vmul.f32 %v358, %v793
      %v800 = vmul.f32 %v436, %v793
      %v801 = vmul.f32 %v361, %v793
      %v802 = vmul.f32 %v437, %v793
      %v803 = vmul.f32 %v364, %v793
      %v804 = vmul.f32 %v438, %v793
      %v805 = vmul.f32 %v367, %v793
      %v806 = vmul.f32 %v439, %v793
      %v807 = vmul.f32 %v370, %v793
      %v808 = vmul.f32 %v440, %v793
      %v809 = vmul.f32 %v373, %v793
      %v810 = vmul.f32 %v441, %v793
      %v811 = vmul.f32 %v376, %v793
      %v812 = vmul.f32 %v442, %v793
      %v813 = vmul.f32 %v379, %v793
      %v814 = vmul.f32 %v443, %v793
      %v815 = vmul.f32 %v382, %v793
      %v816 = vmul.f32 %v444, %v793
      %v817 = vmul.f32 %v385, %v793
      %v818 = vmul.f32 %v445, %v793
      %v819 = vmul.f32 %v388, %v793
      %v820 = vmul.f32 %v446, %v793
      %v821 = vmul.f32 %v391, %v793
      %v822 = vmul.f32 %v447, %v793
      %v823 = vmul.f32 %v394, %v793
      %v824 = vmul.f32 %v448, %v793
      %v825 = vmul.f32 %v397, %v793
      %v826 = vadd.f32 %v758, %v794
      %v827 = vadd.f32 %v759, %v795
      %v828 = vadd.f32 %v760, %v796
      %v829 = vadd.f32 %v761, %v797
      %v830 = vadd.f32 %v762, %v798
      %v831 = vadd.f32 %v763, %v799
      %v832 = vadd.f32 %v764, %v800
      %v833 = vadd.f32 %v765, %v801
      %v834 = vadd.f32 %v766, %v802
      %v835 = vadd.f32 %v767, %v803
      %v836 = vadd.f32 %v768, %v804
      %v837 = vadd.f32 %v769, %v805
      %v838 = vadd.f32 %v770, %v806
      %v839 = vadd.f32 %v771, %v807
      %v840 = vadd.f32 %v772, %v808
      %v841 = vadd.f32 %v773, %v809
      %v842 = vadd.f32 %v774, %v810
      %v843 = vadd.f32 %v775, %v811
      %v844 = vadd.f32 %v776, %v812
      %v845 = vadd.f32 %v777, %v813
      %v846 = vadd.f32 %v778, %v814
      %v847 = vadd.f32 %v779, %v815
      %v848 = vadd.f32 %v780, %v816
      %v849 = vadd.f32 %v781, %v817
      %v850 = vadd.f32 %v782, %v818
      %v851 = vadd.f32 %v783, %v819
      %v852 = vadd.f32 %v784, %v820
      %v853 = vadd.f32 %v785, %v821
      %v854 = vadd.f32 %v786, %v822
      %v855 = vadd.f32 %v787, %v823
      %v856 = vadd.f32 %v788, %v824
      %v857 = vadd.f32 %v789, %v825
      %v858 = vlaneseq
      %v859 = vshrl.u32 %v858, 7
      %v860 = vsub.s32 2, %v859
      %v861 = vrot.slane %v312, %v860
      %v862 = vmul.f32 %v454, %v861
      %v863 = vmul.f32 %v535, %v861
      %v864 = vmul.f32 %v457, %v861
      %v865 = vmul.f32 %v536, %v861
      %v866 = vmul.f32 %v460, %v861
      %v867 = vmul.f32 %v537, %v861
      %v868 = vmul.f32 %v463, %v861
      %v869 = vmul.f32 %v538, %v861
      %v870 = vmul.f32 %v466, %v861
      %v871 = vmul.f32 %v539, %v861
      %v872 = vmul.f32 %v469, %v861
      %v873 = vmul.f32 %v540, %v861
      %v874 = vmul.f32 %v472, %v861
      %v875 = vmul.f32 %v541, %v861
      %v876 = vmul.f32 %v475, %v861
      %v877 = vmul.f32 %v542, %v861
      %v878 = vmul.f32 %v478, %v861
      %v879 = vmul.f32 %v543, %v861
      %v880 = vmul.f32 %v481, %v861
      %v881 = vmul.f32 %v544, %v861
      %v882 = vmul.f32 %v484, %v861
      %v883 = vmul.f32 %v545, %v861
      %v884 = vmul.f32 %v487, %v861
      %v885 = vmul.f32 %v546, %v861
      %v886 = vmul.f32 %v490, %v861
      %v887 = vmul.f32 %v547, %v861
      %v888 = vmul.f32 %v493, %v861
      %v889 = vmul.f32 %v548, %v861
      %v890 = vmul.f32 %v496, %v861
      %v891 = vmul.f32 %v549, %v861
      %v892 = vmul.f32 %v499, %v861
      %v893 = vmul.f32 %v550, %v861
      %v894 = vadd.f32 %v826, %v862
      %v895 = vadd.f32 %v827, %v863
      %v896 = vadd.f32 %v828, %v864
      %v897 = vadd.f32 %v829, %v865
      %v898 = vadd.f32 %v830, %v866
      %v899 = vadd.f32 %v831, %v867
      %v900 = vadd.f32 %v832, %v868
      %v901 = vadd.f32 %v833, %v869
      %v902 = vadd.f32 %v834, %v870
      %v903 = vadd.f32 %v835, %v871
      %v904 = vadd.f32 %v836, %v872
      %v905 = vadd.f32 %v837, %v873
      %v906 = vadd.f32 %v838, %v874
      %v907 = vadd.f32 %v839, %v875
      %v908 = vadd.f32 %v840, %v876
      %v909 = vadd.f32 %v841, %v877
      %v910 = vadd.f32 %v842, %v878
      %v911 = vadd.f32 %v843, %v879
      %v912 = vadd.f32 %v844, %v880
      %v913 = vadd.f32 %v845, %v881
      %v914 = vadd.f32 %v846, %v882
      %v915 = vadd.f32 %v847, %v883
      %v916 = vadd.f32 %v848, %v884
      %v917 = vadd.f32 %v849, %v885
      %v918 = vadd.f32 %v850, %v886
      %v919 = vadd.f32 %v851, %v887
      %v920 = vadd.f32 %v852, %v888
      %v921 = vadd.f32 %v853, %v889
      %v922 = vadd.f32 %v854, %v890
      %v923 = vadd.f32 %v855, %v891
      %v924 = vadd.f32 %v856, %v892
      %v925 = vadd.f32 %v857, %v893
      %v926 = vlaneseq
      %v927 = vshrl.u32 %v926, 7
      %v928 = vsub.s32 0, %v927
      %v929 = vrot.slane %v313, %v928
      %v930 = vmul.f32 %v434, %v929
      %v931 = vmul.f32 %v355, %v929
      %v932 = vmul.f32 %v435, %v929
      %v933 = vmul.f32 %v358, %v929
      %v934 = vmul.f32 %v436, %v929
      %v935 = vmul.f32 %v361, %v929
      %v936 = vmul.f32 %v437, %v929
      %v937 = vmul.f32 %v364, %v929
      %v938 = vmul.f32 %v438, %v929
      %v939 = vmul.f32 %v367, %v929
      %v940 = vmul.f32 %v439, %v929
      %v941 = vmul.f32 %v370, %v929
      %v942 = vmul.f32 %v440, %v929
      %v943 = vmul.f32 %v373, %v929
      %v944 = vmul.f32 %v441, %v929
      %v945 = vmul.f32 %v376, %v929
      %v946 = vmul.f32 %v442, %v929
      %v947 = vmul.f32 %v379, %v929
      %v948 = vmul.f32 %v443, %v929
      %v949 = vmul.f32 %v382, %v929
      %v950 = vmul.f32 %v444, %v929
      %v951 = vmul.f32 %v385, %v929
      %v952 = vmul.f32 %v445, %v929
      %v953 = vmul.f32 %v388, %v929
      %v954 = vmul.f32 %v446, %v929
      %v955 = vmul.f32 %v391, %v929
      %v956 = vmul.f32 %v447, %v929
      %v957 = vmul.f32 %v394, %v929
      %v958 = vmul.f32 %v448, %v929
      %v959 = vmul.f32 %v397, %v929
      %v960 = vmul.f32 %v432, %v929
      %v961 = vmul.f32 %v349, %v929
      %v962 = vadd.f32 %v894, %v930
      %v963 = vadd.f32 %v895, %v931
      %v964 = vadd.f32 %v896, %v932
      %v965 = vadd.f32 %v897, %v933
      %v966 = vadd.f32 %v898, %v934
      %v967 = vadd.f32 %v899, %v935
      %v968 = vadd.f32 %v900, %v936
      %v969 = vadd.f32 %v901, %v937
      %v970 = vadd.f32 %v902, %v938
      %v971 = vadd.f32 %v903, %v939
      %v972 = vadd.f32 %v904, %v940
      %v973 = vadd.f32 %v905, %v941
      %v974 = vadd.f32 %v906, %v942
      %v975 = vadd.f32 %v907, %v943
      %v976 = vadd.f32 %v908, %v944
      %v977 = vadd.f32 %v909, %v945
      %v978 = vadd.f32 %v910, %v946
      %v979 = vadd.f32 %v911, %v947
      %v980 = vadd.f32 %v912, %v948
      %v981 = vadd.f32 %v913, %v949
      %v982 = vadd.f32 %v914, %v950
      %v983 = vadd.f32 %v915, %v951
      %v984 = vadd.f32 %v916, %v952
      %v985 = vadd.f32 %v917, %v953
      %v986 = vadd.f32 %v918, %v954
      %v987 = vadd.f32 %v919, %v955
      %v988 = vadd.f32 %v920, %v956
      %v989 = vadd.f32 %v921, %v957
      %v990 = vadd.f32 %v922, %v958
      %v991 = vadd.f32 %v923, %v959
      %v992 = vadd.f32 %v924, %v960
      %v993 = vadd.f32 %v925, %v961
      %v994 = vlaneseq
      %v995 = vshrl.u32 %v994, 7
      %v996 = vsub.s32 1, %v995
      %v997 = vrot.slane %v313, %v996
      %v998 = vmul.f32 %v281, %v997
      %v999 = vmul.f32 %v282, %v997
      %v1000 = vmul.f32 %v283, %v997
      %v1001 = vmul.f32 %v284, %v997
      %v1002 = vmul.f32 %v285, %v997
      %v1003 = vmul.f32 %v286, %v997
      %v1004 = vmul.f32 %v287, %v997
      %v1005 = vmul.f32 %v288, %v997
      %v1006 = vmul.f32 %v289, %v997
      %v1007 = vmul.f32 %v290, %v997
      %v1008 = vmul.f32 %v291, %v997
      %v1009 = vmul.f32 %v292, %v997
      %v1010 = vmul.f32 %v293, %v997
      %v1011 = vmul.f32 %v294, %v997
      %v1012 = vmul.f32 %v295, %v997
      %v1013 = vmul.f32 %v296, %v997
      %v1014 = vmul.f32 %v297, %v997
      %v1015 = vmul.f32 %v298, %v997
      %v1016 = vmul.f32 %v299, %v997
      %v1017 = vmul.f32 %v300, %v997
      %v1018 = vmul.f32 %v301, %v997
      %v1019 = vmul.f32 %v302, %v997
      %v1020 = vmul.f32 %v303, %v997
      %v1021 = vmul.f32 %v304, %v997
      %v1022 = vmul.f32 %v305, %v997
      %v1023 = vmul.f32 %v306, %v997
      %v1024 = vmul.f32 %v307, %v997
      %v1025 = vmul.f32 %v308, %v997
      %v1026 = vmul.f32 %v309, %v997
      %v1027 = vmul.f32 %v310, %v997
      %v1028 = vmul.f32 %v997, 0.0
      %v1029 = vadd.f32 %v962, %v998
      %v1030 = vadd.f32 %v963, %v999
      %v1031 = vadd.f32 %v964, %v1000
      %v1032 = vadd.f32 %v965, %v1001
      %v1033 = vadd.f32 %v966, %v1002
      %v1034 = vadd.f32 %v967, %v1003
      %v1035 = vadd.f32 %v968, %v1004
      %v1036 = vadd.f32 %v969, %v1005
      %v1037 = vadd.f32 %v970, %v1006
      %v1038 = vadd.f32 %v971, %v1007
      %v1039 = vadd.f32 %v972, %v1008
      %v1040 = vadd.f32 %v973, %v1009
      %v1041 = vadd.f32 %v974, %v1010
      %v1042 = vadd.f32 %v975, %v1011
      %v1043 = vadd.f32 %v976, %v1012
      %v1044 = vadd.f32 %v977, %v1013
      %v1045 = vadd.f32 %v978, %v1014
      %v1046 = vadd.f32 %v979, %v1015
      %v1047 = vadd.f32 %v980, %v1016
      %v1048 = vadd.f32 %v981, %v1017
      %v1049 = vadd.f32 %v982, %v1018
      %v1050 = vadd.f32 %v983, %v1019
      %v1051 = vadd.f32 %v984, %v1020
      %v1052 = vadd.f32 %v985, %v1021
      %v1053 = vadd.f32 %v986, %v1022
      %v1054 = vadd.f32 %v987, %v1023
      %v1055 = vadd.f32 %v988, %v1024
      %v1056 = vadd.f32 %v989, %v1025
      %v1057 = vadd.f32 %v990, %v1026
      %v1058 = vadd.f32 %v991, %v1027
      %v1059 = vadd.f32 %v992, %v1028
      %v1060 = vadd.f32 %v993, %v1028
      %v1061 = vlaneseq
      %v1062 = vshrl.u32 %v1061, 7
      %v1063 = vsub.s32 2, %v1062
      %v1064 = vrot.slane %v313, %v1063
      %v1065 = vmul.f32 %v457, %v1064
      %v1066 = vmul.f32 %v536, %v1064
      %v1067 = vmul.f32 %v460, %v1064
      %v1068 = vmul.f32 %v537, %v1064
      %v1069 = vmul.f32 %v463, %v1064
      %v1070 = vmul.f32 %v538, %v1064
      %v1071 = vmul.f32 %v466, %v1064
      %v1072 = vmul.f32 %v539, %v1064
      %v1073 = vmul.f32 %v469, %v1064
      %v1074 = vmul.f32 %v540, %v1064
      %v1075 = vmul.f32 %v472, %v1064
      %v1076 = vmul.f32 %v541, %v1064
      %v1077 = vmul.f32 %v475, %v1064
      %v1078 = vmul.f32 %v542, %v1064
      %v1079 = vmul.f32 %v478, %v1064
      %v1080 = vmul.f32 %v543, %v1064
      %v1081 = vmul.f32 %v481, %v1064
      %v1082 = vmul.f32 %v544, %v1064
      %v1083 = vmul.f32 %v484, %v1064
      %v1084 = vmul.f32 %v545, %v1064
      %v1085 = vmul.f32 %v487, %v1064
      %v1086 = vmul.f32 %v546, %v1064
      %v1087 = vmul.f32 %v490, %v1064
      %v1088 = vmul.f32 %v547, %v1064
      %v1089 = vmul.f32 %v493, %v1064
      %v1090 = vmul.f32 %v548, %v1064
      %v1091 = vmul.f32 %v496, %v1064
      %v1092 = vmul.f32 %v549, %v1064
      %v1093 = vmul.f32 %v499, %v1064
      %v1094 = vmul.f32 %v550, %v1064
      %v1095 = vmul.f32 %v451, %v1064
      %v1096 = vmul.f32 %v534, %v1064
      %v1097 = vadd.f32 %v1029, %v1065
      %v1098 = vadd.f32 %v1030, %v1066
      %v1099 = vadd.f32 %v1031, %v1067
      %v1100 = vadd.f32 %v1032, %v1068
      %v1101 = vadd.f32 %v1033, %v1069
      %v1102 = vadd.f32 %v1034, %v1070
      %v1103 = vadd.f32 %v1035, %v1071
      %v1104 = vadd.f32 %v1036, %v1072
      %v1105 = vadd.f32 %v1037, %v1073
      %v1106 = vadd.f32 %v1038, %v1074
      %v1107 = vadd.f32 %v1039, %v1075
      %v1108 = vadd.f32 %v1040, %v1076
      %v1109 = vadd.f32 %v1041, %v1077
      %v1110 = vadd.f32 %v1042, %v1078
      %v1111 = vadd.f32 %v1043, %v1079
      %v1112 = vadd.f32 %v1044, %v1080
      %v1113 = vadd.f32 %v1045, %v1081
      %v1114 = vadd.f32 %v1046, %v1082
      %v1115 = vadd.f32 %v1047, %v1083
      %v1116 = vadd.f32 %v1048, %v1084
      %v1117 = vadd.f32 %v1049, %v1085
      %v1118 = vadd.f32 %v1050, %v1086
      %v1119 = vadd.f32 %v1051, %v1087
      %v1120 = vadd.f32 %v1052, %v1088
      %v1121 = vadd.f32 %v1053, %v1089
      %v1122 = vadd.f32 %v1054, %v1090
      %v1123 = vadd.f32 %v1055, %v1091
      %v1124 = vadd.f32 %v1056, %v1092
      %v1125 = vadd.f32 %v1057, %v1093
      %v1126 = vadd.f32 %v1058, %v1094
      %v1127 = vadd.f32 %v1059, %v1095
      %v1128 = vadd.f32 %v1060, %v1096
      %v1129 = vld [vmem:[%s2] sm:$0x1]
      %v1131 = vlaneseq
      %v1132 = vshrl.u32 %v1131, 7
      %v1133 = vsub.s32 0, %v1132
      %v1134 = vrot.slane %v1129, %v1133
      %v1136 = vadd.f32 %v1097, %v1134
      %v1137 = vadd.f32 %v1098, %v1134
      %v1138 = vadd.f32 %v1099, %v1134
      %v1139 = vadd.f32 %v1100, %v1134
      %v1140 = vadd.f32 %v1101, %v1134
      %v1141 = vadd.f32 %v1102, %v1134
      %v1142 = vadd.f32 %v1103, %v1134
      %v1143 = vadd.f32 %v1104, %v1134
      %v1144 = vadd.f32 %v1105, %v1134
      %v1145 = vadd.f32 %v1106, %v1134
      %v1146 = vadd.f32 %v1107, %v1134
      %v1147 = vadd.f32 %v1108, %v1134
      %v1148 = vadd.f32 %v1109, %v1134
      %v1149 = vadd.f32 %v1110, %v1134
      %v1150 = vadd.f32 %v1111, %v1134
      %v1151 = vadd.f32 %v1112, %v1134
      %v1152 = vadd.f32 %v1113, %v1134
      %v1153 = vadd.f32 %v1114, %v1134
      %v1154 = vadd.f32 %v1115, %v1134
      %v1155 = vadd.f32 %v1116, %v1134
      %v1156 = vadd.f32 %v1117, %v1134
      %v1157 = vadd.f32 %v1118, %v1134
      %v1158 = vadd.f32 %v1119, %v1134
      %v1159 = vadd.f32 %v1120, %v1134
      %v1160 = vadd.f32 %v1121, %v1134
      %v1161 = vadd.f32 %v1122, %v1134
      %v1162 = vadd.f32 %v1123, %v1134
      %v1163 = vadd.f32 %v1124, %v1134
      %v1164 = vadd.f32 %v1125, %v1134
      %v1165 = vadd.f32 %v1126, %v1134
      %v1166 = vadd.f32 %v1127, %v1134
      %v1167 = vadd.f32 %v1128, %v1134
      %v1168 = vmax.f32 %v1136, 0.0
      %v1169 = vmax.f32 %v1137, 0.0
      %v1170 = vmax.f32 %v1138, 0.0
      %v1171 = vmax.f32 %v1139, 0.0
      %v1172 = vmax.f32 %v1140, 0.0
      %v1173 = vmax.f32 %v1141, 0.0
      %v1174 = vmax.f32 %v1142, 0.0
      %v1175 = vmax.f32 %v1143, 0.0
      %v1176 = vmax.f32 %v1144, 0.0
      %v1177 = vmax.f32 %v1145, 0.0
      %v1178 = vmax.f32 %v1146, 0.0
      %v1179 = vmax.f32 %v1147, 0.0
      %v1180 = vmax.f32 %v1148, 0.0
      %v1181 = vmax.f32 %v1149, 0.0
      %v1182 = vmax.f32 %v1150, 0.0
      %v1183 = vmax.f32 %v1151, 0.0
      %v1184 = vmax.f32 %v1152, 0.0
      %v1185 = vmax.f32 %v1153, 0.0
      %v1186 = vmax.f32 %v1154, 0.0
      %v1187 = vmax.f32 %v1155, 0.0
      %v1188 = vmax.f32 %v1156, 0.0
      %v1189 = vmax.f32 %v1157, 0.0
      %v1190 = vmax.f32 %v1158, 0.0
      %v1191 = vmax.f32 %v1159, 0.0
      %v1192 = vmax.f32 %v1160, 0.0
      %v1193 = vmax.f32 %v1161, 0.0
      %v1194 = vmax.f32 %v1162, 0.0
      %v1195 = vmax.f32 %v1163, 0.0
      %v1196 = vmax.f32 %v1164, 0.0
      %v1197 = vmax.f32 %v1165, 0.0
      %v1198 = vmax.f32 %v1166, 0.0
      %v1199 = vmax.f32 %v1167, 0.0
      %v1200 = vmin.f32 %v1168, 6.0
      %v1201 = vmin.f32 %v1169, 6.0
      %v1202 = vmin.f32 %v1170, 6.0
      %v1203 = vmin.f32 %v1171, 6.0
      %v1204 = vmin.f32 %v1172, 6.0
      %v1205 = vmin.f32 %v1173, 6.0
      %v1206 = vmin.f32 %v1174, 6.0
      %v1207 = vmin.f32 %v1175, 6.0
      %v1208 = vmin.f32 %v1176, 6.0
      %v1209 = vmin.f32 %v1177, 6.0
      %v1210 = vmin.f32 %v1178, 6.0
      %v1211 = vmin.f32 %v1179, 6.0
      %v1212 = vmin.f32 %v1180, 6.0
      %v1213 = vmin.f32 %v1181, 6.0
      %v1214 = vmin.f32 %v1182, 6.0
      %v1215 = vmin.f32 %v1183, 6.0
      %v1216 = vmin.f32 %v1184, 6.0
      %v1217 = vmin.f32 %v1185, 6.0
      %v1218 = vmin.f32 %v1186, 6.0
      %v1219 = vmin.f32 %v1187, 6.0
      %v1220 = vmin.f32 %v1188, 6.0
      %v1221 = vmin.f32 %v1189, 6.0
      %v1222 = vmin.f32 %v1190, 6.0
      %v1223 = vmin.f32 %v1191, 6.0
      %v1224 = vmin.f32 %v1192, 6.0
      %v1225 = vmin.f32 %v1193, 6.0
      %v1226 = vmin.f32 %v1194, 6.0
      %v1227 = vmin.f32 %v1195, 6.0
      %v1228 = vmin.f32 %v1196, 6.0
      %v1229 = vmin.f32 %v1197, 6.0
      %v1230 = vmin.f32 %v1198, 6.0
      %v1231 = vmin.f32 %v1199, 6.0
      %v1232 = vld [vmem:[%s3] sm:$0xff]
      %v1233 = vld [vmem:[%s4] sm:$0x1]
      %v1235 = vlaneseq
      %v1236 = vshrl.u32 %v1235, 7
      %v1237 = vsub.s32 0, %v1236
      %v1238 = vrot.slane %v1233, %v1237
      %vm1240 = vcmask 64512
      %v1242 = vsel %vm1240, %v1200, 0
      %v1245 = vsel %vm1240, %v1201, 0
      %v1248 = vsel %vm1240, %v1202, 0
      %v1251 = vsel %vm1240, %v1203, 0
      %v1254 = vsel %vm1240, %v1204, 0
      %v1257 = vsel %vm1240, %v1205, 0
      %v1260 = vsel %vm1240, %v1206, 0
      %v1263 = vsel %vm1240, %v1207, 0
      %v1266 = vsel %vm1240, %v1208, 0
      %v1269 = vsel %vm1240, %v1209, 0
      %v1272 = vsel %vm1240, %v1210, 0
      %v1275 = vsel %vm1240, %v1211, 0
      %v1278 = vsel %vm1240, %v1212, 0
      %v1281 = vsel %vm1240, %v1213, 0
      %v1284 = vsel %vm1240, %v1214, 0
      %v1287 = vsel %vm1240, %v1215, 0
      %v1290 = vsel %vm1240, %v1216, 0
      %v1293 = vsel %vm1240, %v1217, 0
      %v1296 = vsel %vm1240, %v1218, 0
      %v1299 = vsel %vm1240, %v1219, 0
      %v1302 = vsel %vm1240, %v1220, 0
      %v1305 = vsel %vm1240, %v1221, 0
      %v1308 = vsel %vm1240, %v1222, 0
      %v1311 = vsel %vm1240, %v1223, 0
      %v1314 = vsel %vm1240, %v1224, 0
      %v1317 = vsel %vm1240, %v1225, 0
      %v1320 = vsel %vm1240, %v1226, 0
      %v1323 = vsel %vm1240, %v1227, 0
      %v1326 = vsel %vm1240, %v1228, 0
      %v1329 = vsel %vm1240, %v1229, 0
      %v1332 = vsel %vm1240, %v1230, 0
      %v1335 = vsel %vm1240, %v1231, 0
      %1337 = vmatprep.subr.mxu0 0.0
      %1338 = vmatpush1.msra.mxu0 %v1232
      %1339 = vmatprep.subr.mxu0 0.0
      %1340 = vmatpush1.msra.mxu0 0.0
      %1341 = vmatprep.subr.mxu0 0.0
      %1342 = vmatpush1.msra.mxu0 0.0
      %1343 = vmatprep.subr.mxu0 0.0
      %1344 = vmatpush1.msra.mxu0 0.0
      %1345 = vmatprep.subr.mxu0 0.0
      %1346 = vmatpush1.msra.mxu0 0.0
      %1347 = vmatprep.subr.mxu0 0.0
      %1348 = vmatpush1.msra.mxu0 0.0
      %1349 = vmatprep.subr.mxu0 0.0
      %1350 = vmatpush1.msra.mxu0 0.0
      %1351 = vmatprep.subr.mxu0 0.0
      %1352 = vmatpush1.msra.mxu0 0.0
      %1353 = vmatprep.subr.mxu0 0.0
      %1354 = vmatpush1.msra.mxu0 0.0
      %1355 = vmatprep.subr.mxu0 0.0
      %1356 = vmatpush1.msra.mxu0 0.0
      %1357 = vmatprep.subr.mxu0 0.0
      %1358 = vmatpush1.msra.mxu0 0.0
      %1359 = vmatprep.subr.mxu0 0.0
      %1360 = vmatpush1.msra.mxu0 0.0
      %1361 = vmatprep.subr.mxu0 0.0
      %1362 = vmatpush1.msra.mxu0 0.0
      %1363 = vmatprep.subr.mxu0 0.0
      %1364 = vmatpush1.msra.mxu0 0.0
      %1365 = vmatprep.subr.mxu0 0.0
      %1366 = vmatpush1.msra.mxu0 0.0
      %1367 = vmatprep.subr.mxu0 0.0
      %1368 = vmatpush1.msra.mxu0 0.0
      %1369 = vmatprep.subr.mxu0 0.0
      %1370 = vmatpush1.msra.mxu0 0.0
      %1371 = vmatprep.subr.mxu0 0.0
      %1372 = vmatpush1.msra.mxu0 0.0
      %1373 = vmatprep.subr.mxu0 0.0
      %1374 = vmatpush1.msra.mxu0 0.0
      %1375 = vmatprep.subr.mxu0 0.0
      %1376 = vmatpush1.msra.mxu0 0.0
      %1377 = vmatprep.subr.mxu0 0.0
      %1378 = vmatpush1.msra.mxu0 0.0
      %1379 = vmatprep.subr.mxu0 0.0
      %1380 = vmatpush1.msra.mxu0 0.0
      %1381 = vmatprep.subr.mxu0 0.0
      %1382 = vmatpush1.msra.mxu0 0.0
      %1383 = vmatprep.subr.mxu0 0.0
      %1384 = vmatpush1.msra.mxu0 0.0
      %1385 = vmatprep.subr.mxu0 0.0
      %1386 = vmatpush1.msra.mxu0 0.0
      %1387 = vmatprep.subr.mxu0 0.0
      %1388 = vmatpush1.msra.mxu0 0.0
      %1389 = vmatprep.subr.mxu0 0.0
      %1390 = vmatpush1.msra.mxu0 0.0
      %1391 = vmatprep.subr.mxu0 0.0
      %1392 = vmatpush1.msra.mxu0 0.0
      %1393 = vmatprep.subr.mxu0 0.0
      %1394 = vmatpush1.msra.mxu0 0.0
      %1395 = vmatprep.subr.mxu0 0.0
      %1396 = vmatpush1.msra.mxu0 0.0
      %1397 = vmatprep.subr.mxu0 0.0
      %1398 = vmatpush1.msra.mxu0 0.0
      %1399 = vmatprep.subr.mxu0 0.0
      %1400 = vmatpush1.msra.mxu0 0.0
      %1401 = vmatprep.mubr.f32.mxu0 0.0
      %1402 = vmatmul.mubr.f32.gmra.mrb[0].mxu0 %v1242
      %v1403 = vpop.f32.mrb[0].mxu0
      %v1404 = vadd.f32 %v1238, %v1403
      %v1405 = vpop.f32.mrb[0].mxu0
      %1406 = vmatprep.mubr.f32.mxu0 0.0
      %1407 = vmatmul.mubr.f32.gmra.mrb[0].mxu0 %v1245
      %v1408 = vpop.f32.mrb[0].mxu0
      %v1409 = vadd.f32 %v1238, %v1408
      %v1410 = vpop.f32.mrb[0].mxu0
      %1411 = vmatprep.mubr.f32.mxu0 0.0
      %1412 = vmatmul.mubr.f32.gmra.mrb[0].mxu0 %v1248
      %v1413 = vpop.f32.mrb[0].mxu0
      %v1414 = vadd.f32 %v1238, %v1413
      %v1415 = vpop.f32.mrb[0].mxu0
      %1416 = vmatprep.mubr.f32.mxu0 0.0
      %1417 = vmatmul.mubr.f32.gmra.mrb[0].mxu0 %v1251
      %v1418 = vpop.f32.mrb[0].mxu0
      %v1419 = vadd.f32 %v1238, %v1418
      %v1420 = vpop.f32.mrb[0].mxu0
      %1421 = vmatprep.mubr.f32.mxu0 0.0
      %1422 = vmatmul.mubr.f32.gmra.mrb[0].mxu0 %v1254
      %v1423 = vpop.f32.mrb[0].mxu0
      %v1424 = vadd.f32 %v1238, %v1423
      %v1425 = vpop.f32.mrb[0].mxu0
      %1426 = vmatprep.mubr.f32.mxu0 0.0
      %1427 = vmatmul.mubr.f32.gmra.mrb[0].mxu0 %v1257
      %v1428 = vpop.f32.mrb[0].mxu0
      %v1429 = vadd.f32 %v1238, %v1428
      %v1430 = vpop.f32.mrb[0].mxu0
      %1431 = vmatprep.mubr.f32.mxu0 0.0
      %1432 = vmatmul.mubr.f32.gmra.mrb[0].mxu0 %v1260
      %v1433 = vpop.f32.mrb[0].mxu0
      %v1434 = vadd.f32 %v1238, %v1433
      %v1435 = vpop.f32.mrb[0].mxu0
      %1436 = vmatprep.mubr.f32.mxu0 0.0
      %1437 = vmatmul.mubr.f32.gmra.mrb[0].mxu0 %v1263
      %v1438 = vpop.f32.mrb[0].mxu0
      %v1439 = vadd.f32 %v1238, %v1438
      %v1440 = vpop.f32.mrb[0].mxu0
      %1441 = vmatprep.mubr.f32.mxu0 0.0
      %1442 = vmatmul.mubr.f32.gmra.mrb[0].mxu0 %v1266
      %v1443 = vpop.f32.mrb[0].mxu0
      %v1444 = vadd.f32 %v1238, %v1443
      %v1445 = vpop.f32.mrb[0].mxu0
      %1446 = vmatprep.mubr.f32.mxu0 0.0
      %1447 = vmatmul.mubr.f32.gmra.mrb[0].mxu0 %v1269
      %v1448 = vpop.f32.mrb[0].mxu0
      %v1449 = vadd.f32 %v1238, %v1448
      %v1450 = vpop.f32.mrb[0].mxu0
      %1451 = vmatprep.mubr.f32.mxu0 0.0
      %1452 = vmatmul.mubr.f32.gmra.mrb[0].mxu0 %v1272
      %v1453 = vpop.f32.mrb[0].mxu0
      %v1454 = vadd.f32 %v1238, %v1453
      %v1455 = vpop.f32.mrb[0].mxu0
      %1456 = vmatprep.mubr.f32.mxu0 0.0
      %1457 = vmatmul.mubr.f32.gmra.mrb[0].mxu0 %v1275
      %v1458 = vpop.f32.mrb[0].mxu0
      %v1459 = vadd.f32 %v1238, %v1458
      %v1460 = vpop.f32.mrb[0].mxu0
      %1461 = vmatprep.mubr.f32.mxu0 0.0
      %1462 = vmatmul.mubr.f32.gmra.mrb[0].mxu0 %v1278
      %v1463 = vpop.f32.mrb[0].mxu0
      %v1464 = vadd.f32 %v1238, %v1463
      %v1465 = vpop.f32.mrb[0].mxu0
      %1466 = vmatprep.mubr.f32.mxu0 0.0
      %1467 = vmatmul.mubr.f32.gmra.mrb[0].mxu0 %v1281
      %v1468 = vpop.f32.mrb[0].mxu0
      %v1469 = vadd.f32 %v1238, %v1468
      %v1470 = vpop.f32.mrb[0].mxu0
      %1471 = vmatprep.mubr.f32.mxu0 0.0
      %1472 = vmatmul.mubr.f32.gmra.mrb[0].mxu0 %v1284
      %v1473 = vpop.f32.mrb[0].mxu0
      %v1474 = vadd.f32 %v1238, %v1473
      %v1475 = vpop.f32.mrb[0].mxu0
      %1476 = vmatprep.mubr.f32.mxu0 0.0
      %1477 = vmatmul.mubr.f32.gmra.mrb[0].mxu0 %v1287
      %v1478 = vpop.f32.mrb[0].mxu0
      %v1479 = vadd.f32 %v1238, %v1478
      %v1480 = vpop.f32.mrb[0].mxu0
      %1481 = vmatprep.mubr.f32.mxu0 0.0
      %1482 = vmatmul.mubr.f32.gmra.mrb[0].mxu0 %v1290
      %v1483 = vpop.f32.mrb[0].mxu0
      %v1484 = vadd.f32 %v1238, %v1483
      %v1485 = vpop.f32.mrb[0].mxu0
      %1486 = vmatprep.mubr.f32.mxu0 0.0
      %1487 = vmatmul.mubr.f32.gmra.mrb[0].mxu0 %v1293
      %v1488 = vpop.f32.mrb[0].mxu0
      %v1489 = vadd.f32 %v1238, %v1488
      %v1490 = vpop.f32.mrb[0].mxu0
      %1491 = vmatprep.mubr.f32.mxu0 0.0
      %1492 = vmatmul.mubr.f32.gmra.mrb[0].mxu0 %v1296
      %v1493 = vpop.f32.mrb[0].mxu0
      %v1494 = vadd.f32 %v1238, %v1493
      %v1495 = vpop.f32.mrb[0].mxu0
      %1496 = vmatprep.mubr.f32.mxu0 0.0
      %1497 = vmatmul.mubr.f32.gmra.mrb[0].mxu0 %v1299
      %v1498 = vpop.f32.mrb[0].mxu0
      %v1499 = vadd.f32 %v1238, %v1498
      %v1500 = vpop.f32.mrb[0].mxu0
      %1501 = vmatprep.mubr.f32.mxu0 0.0
      %1502 = vmatmul.mubr.f32.gmra.mrb[0].mxu0 %v1302
      %v1503 = vpop.f32.mrb[0].mxu0
      %v1504 = vadd.f32 %v1238, %v1503
      %v1505 = vpop.f32.mrb[0].mxu0
      %1506 = vmatprep.mubr.f32.mxu0 0.0
      %1507 = vmatmul.mubr.f32.gmra.mrb[0].mxu0 %v1305
      %v1508 = vpop.f32.mrb[0].mxu0
      %v1509 = vadd.f32 %v1238, %v1508
      %v1510 = vpop.f32.mrb[0].mxu0
      %1511 = vmatprep.mubr.f32.mxu0 0.0
      %1512 = vmatmul.mubr.f32.gmra.mrb[0].mxu0 %v1308
      %v1513 = vpop.f32.mrb[0].mxu0
      %v1514 = vadd.f32 %v1238, %v1513
      %v1515 = vpop.f32.mrb[0].mxu0
      %1516 = vmatprep.mubr.f32.mxu0 0.0
      %1517 = vmatmul.mubr.f32.gmra.mrb[0].mxu0 %v1311
      %v1518 = vpop.f32.mrb[0].mxu0
      %v1519 = vadd.f32 %v1238, %v1518
      %v1520 = vpop.f32.mrb[0].mxu0
      %1521 = vmatprep.mubr.f32.mxu0 0.0
      %1522 = vmatmul.mubr.f32.gmra.mrb[0].mxu0 %v1314
      %v1523 = vpop.f32.mrb[0].mxu0
      %v1524 = vadd.f32 %v1238, %v1523
      %v1525 = vpop.f32.mrb[0].mxu0
      %1526 = vmatprep.mubr.f32.mxu0 0.0
      %1527 = vmatmul.mubr.f32.gmra.mrb[0].mxu0 %v1317
      %v1528 = vpop.f32.mrb[0].mxu0
      %v1529 = vadd.f32 %v1238, %v1528
      %v1530 = vpop.f32.mrb[0].mxu0
      %1531 = vmatprep.mubr.f32.mxu0 0.0
      %1532 = vmatmul.mubr.f32.gmra.mrb[0].mxu0 %v1320
      %v1533 = vpop.f32.mrb[0].mxu0
      %v1534 = vadd.f32 %v1238, %v1533
      %v1535 = vpop.f32.mrb[0].mxu0
      %1536 = vmatprep.mubr.f32.mxu0 0.0
      %1537 = vmatmul.mubr.f32.gmra.mrb[0].mxu0 %v1323
      %v1538 = vpop.f32.mrb[0].mxu0
      %v1539 = vadd.f32 %v1238, %v1538
      %v1540 = vpop.f32.mrb[0].mxu0
      %1541 = vmatprep.mubr.f32.mxu0 0.0
      %1542 = vmatmul.mubr.f32.gmra.mrb[0].mxu0 %v1326
      %v1543 = vpop.f32.mrb[0].mxu0
      %v1544 = vadd.f32 %v1238, %v1543
      %v1545 = vpop.f32.mrb[0].mxu0
      %1546 = vmatprep.mubr.f32.mxu0 0.0
      %1547 = vmatmul.mubr.f32.gmra.mrb[0].mxu0 %v1329
      %v1548 = vpop.f32.mrb[0].mxu0
      %v1549 = vadd.f32 %v1238, %v1548
      %v1550 = vpop.f32.mrb[0].mxu0
      %1551 = vmatprep.mubr.f32.mxu0 0.0
      %1552 = vmatmul.mubr.f32.gmra.mrb[0].mxu0 %v1332
      %v1553 = vpop.f32.mrb[0].mxu0
      %v1554 = vadd.f32 %v1238, %v1553
      %v1555 = vpop.f32.mrb[0].mxu0
      %1556 = vmatprep.mubr.f32.mxu0 0.0
      %1557 = vmatmul.mubr.f32.gmra.mrb[0].mxu0 %v1335
      %v1558 = vpop.f32.mrb[0].mxu0
      %v1559 = vadd.f32 %v1238, %v1558
      %v1560 = vpop.f32.mrb[0].mxu0
      %1561 = vdwg.mxu0
      %v1562 = vmax.f32 %v1404, 0.0
      %v1563 = vmax.f32 %v1409, 0.0
      %v1564 = vmax.f32 %v1414, 0.0
      %v1565 = vmax.f32 %v1419, 0.0
      %v1566 = vmax.f32 %v1424, 0.0
      %v1567 = vmax.f32 %v1429, 0.0
      %v1568 = vmax.f32 %v1434, 0.0
      %v1569 = vmax.f32 %v1439, 0.0
      %v1570 = vmax.f32 %v1444, 0.0
      %v1571 = vmax.f32 %v1449, 0.0
      %v1572 = vmax.f32 %v1454, 0.0
      %v1573 = vmax.f32 %v1459, 0.0
      %v1574 = vmax.f32 %v1464, 0.0
      %v1575 = vmax.f32 %v1469, 0.0
      %v1576 = vmax.f32 %v1474, 0.0
      %v1577 = vmax.f32 %v1479, 0.0
      %v1578 = vmax.f32 %v1484, 0.0
      %v1579 = vmax.f32 %v1489, 0.0
      %v1580 = vmax.f32 %v1494, 0.0
      %v1581 = vmax.f32 %v1499, 0.0
      %v1582 = vmax.f32 %v1504, 0.0
      %v1583 = vmax.f32 %v1509, 0.0
      %v1584 = vmax.f32 %v1514, 0.0
      %v1585 = vmax.f32 %v1519, 0.0
      %v1586 = vmax.f32 %v1524, 0.0
      %v1587 = vmax.f32 %v1529, 0.0
      %v1588 = vmax.f32 %v1534, 0.0
      %v1589 = vmax.f32 %v1539, 0.0
      %v1590 = vmax.f32 %v1544, 0.0
      %v1591 = vmax.f32 %v1549, 0.0
      %v1592 = vmax.f32 %v1554, 0.0
      %v1593 = vmax.f32 %v1559, 0.0
      %v1594 = vmin.f32 %v1562, 6.0
      %v1595 = vmin.f32 %v1563, 6.0
      %v1596 = vmin.f32 %v1564, 6.0
      %v1597 = vmin.f32 %v1565, 6.0
      %v1598 = vmin.f32 %v1566, 6.0
      %v1599 = vmin.f32 %v1567, 6.0
      %v1600 = vmin.f32 %v1568, 6.0
      %v1601 = vmin.f32 %v1569, 6.0
      %v1602 = vmin.f32 %v1570, 6.0
      %v1603 = vmin.f32 %v1571, 6.0
      %v1604 = vmin.f32 %v1572, 6.0
      %v1605 = vmin.f32 %v1573, 6.0
      %v1606 = vmin.f32 %v1574, 6.0
      %v1607 = vmin.f32 %v1575, 6.0
      %v1608 = vmin.f32 %v1576, 6.0
      %v1609 = vmin.f32 %v1577, 6.0
      %v1610 = vmin.f32 %v1578, 6.0
      %v1611 = vmin.f32 %v1579, 6.0
      %v1612 = vmin.f32 %v1580, 6.0
      %v1613 = vmin.f32 %v1581, 6.0
      %v1614 = vmin.f32 %v1582, 6.0
      %v1615 = vmin.f32 %v1583, 6.0
      %v1616 = vmin.f32 %v1584, 6.0
      %v1617 = vmin.f32 %v1585, 6.0
      %v1618 = vmin.f32 %v1586, 6.0
      %v1619 = vmin.f32 %v1587, 6.0
      %v1620 = vmin.f32 %v1588, 6.0
      %v1621 = vmin.f32 %v1589, 6.0
      %v1622 = vmin.f32 %v1590, 6.0
      %v1623 = vmin.f32 %v1591, 6.0
      %v1624 = vmin.f32 %v1592, 6.0
      %v1625 = vmin.f32 %v1593, 6.0
      %v1626 = vld [vmem:[%s5] sm:$0x7]
      %v1627 = vld [vmem:[%s5 + $0x4] sm:$0x7]
      %v1628 = vld [vmem:[%s5 + $0x8] sm:$0x7]
      %v1661 = vrot.slane %v1594, 7
      %v1662 = vrot.slane %v1595, 7
      %v1663 = vsel %vm347, %v1661, %v1662
      %v1664 = vrot.slane %v1596, 7
      %v1665 = vrot.slane %v1597, 7
      %v1666 = vsel %vm347, %v1664, %v1665
      %v1667 = vrot.slane %v1598, 7
      %v1668 = vrot.slane %v1599, 7
      %v1669 = vsel %vm347, %v1667, %v1668
      %v1670 = vrot.slane %v1600, 7
      %v1671 = vrot.slane %v1601, 7
      %v1672 = vsel %vm347, %v1670, %v1671
      %v1673 = vrot.slane %v1602, 7
      %v1674 = vrot.slane %v1603, 7
      %v1675 = vsel %vm347, %v1673, %v1674
      %v1676 = vrot.slane %v1604, 7
      %v1677 = vrot.slane %v1605, 7
      %v1678 = vsel %vm347, %v1676, %v1677
      %v1679 = vrot.slane %v1606, 7
      %v1680 = vrot.slane %v1607, 7
      %v1681 = vsel %vm347, %v1679, %v1680
      %v1682 = vrot.slane %v1608, 7
      %v1683 = vrot.slane %v1609, 7
      %v1684 = vsel %vm347, %v1682, %v1683
      %v1685 = vrot.slane %v1610, 7
      %v1686 = vrot.slane %v1611, 7
      %v1687 = vsel %vm347, %v1685, %v1686
      %v1688 = vrot.slane %v1612, 7
      %v1689 = vrot.slane %v1613, 7
      %v1690 = vsel %vm347, %v1688, %v1689
      %v1691 = vrot.slane %v1614, 7
      %v1692 = vrot.slane %v1615, 7
      %v1693 = vsel %vm347, %v1691, %v1692
      %v1694 = vrot.slane %v1616, 7
      %v1695 = vrot.slane %v1617, 7
      %v1696 = vsel %vm347, %v1694, %v1695
      %v1697 = vrot.slane %v1618, 7
      %v1698 = vrot.slane %v1619, 7
      %v1699 = vsel %vm347, %v1697, %v1698
      %v1700 = vrot.slane %v1620, 7
      %v1701 = vrot.slane %v1621, 7
      %v1702 = vsel %vm347, %v1700, %v1701
      %v1703 = vrot.slane %v1622, 7
      %v1704 = vrot.slane %v1623, 7
      %v1705 = vsel %vm347, %v1703, %v1704
      %v1706 = vrot.slane %v1624, 7
      %v1707 = vrot.slane %v1625, 7
      %v1708 = vsel %vm347, %v1706, %v1707
      %v1741 = vsel %vm347, 0.0, %v1661
      %v1742 = vsel %vm347, 0.0, %v1664
      %v1743 = vsel %vm347, 0.0, %v1667
      %v1744 = vsel %vm347, 0.0, %v1670
      %v1745 = vsel %vm347, 0.0, %v1673
      %v1746 = vsel %vm347, 0.0, %v1676
      %v1747 = vsel %vm347, 0.0, %v1679
      %v1748 = vsel %vm347, 0.0, %v1682
      %v1749 = vsel %vm347, 0.0, %v1685
      %v1750 = vsel %vm347, 0.0, %v1688
      %v1751 = vsel %vm347, 0.0, %v1691
      %v1752 = vsel %vm347, 0.0, %v1694
      %v1753 = vsel %vm347, 0.0, %v1697
      %v1754 = vsel %vm347, 0.0, %v1700
      %v1755 = vsel %vm347, 0.0, %v1703
      %v1756 = vsel %vm347, 0.0, %v1706
      %v1757 = vrot.slane %v1594, 1
      %v1758 = vrot.slane %v1595, 1
      %v1759 = vsel %vm449, %v1757, %v1758
      %v1760 = vrot.slane %v1596, 1
      %v1761 = vrot.slane %v1597, 1
      %v1762 = vsel %vm449, %v1760, %v1761
      %v1763 = vrot.slane %v1598, 1
      %v1764 = vrot.slane %v1599, 1
      %v1765 = vsel %vm449, %v1763, %v1764
      %v1766 = vrot.slane %v1600, 1
      %v1767 = vrot.slane %v1601, 1
      %v1768 = vsel %vm449, %v1766, %v1767
      %v1769 = vrot.slane %v1602, 1
      %v1770 = vrot.slane %v1603, 1
      %v1771 = vsel %vm449, %v1769, %v1770
      %v1772 = vrot.slane %v1604, 1
      %v1773 = vrot.slane %v1605, 1
      %v1774 = vsel %vm449, %v1772, %v1773
      %v1775 = vrot.slane %v1606, 1
      %v1776 = vrot.slane %v1607, 1
      %v1777 = vsel %vm449, %v1775, %v1776
      %v1778 = vrot.slane %v1608, 1
      %v1779 = vrot.slane %v1609, 1
      %v1780 = vsel %vm449, %v1778, %v1779
      %v1781 = vrot.slane %v1610, 1
      %v1782 = vrot.slane %v1611, 1
      %v1783 = vsel %vm449, %v1781, %v1782
      %v1784 = vrot.slane %v1612, 1
      %v1785 = vrot.slane %v1613, 1
      %v1786 = vsel %vm449, %v1784, %v1785
      %v1787 = vrot.slane %v1614, 1
      %v1788 = vrot.slane %v1615, 1
      %v1789 = vsel %vm449, %v1787, %v1788
      %v1790 = vrot.slane %v1616, 1
      %v1791 = vrot.slane %v1617, 1
      %v1792 = vsel %vm449, %v1790, %v1791
      %v1793 = vrot.slane %v1618, 1
      %v1794 = vrot.slane %v1619, 1
      %v1795 = vsel %vm449, %v1793, %v1794
      %v1796 = vrot.slane %v1620, 1
      %v1797 = vrot.slane %v1621, 1
      %v1798 = vsel %vm449, %v1796, %v1797
      %v1799 = vrot.slane %v1622, 1
      %v1800 = vrot.slane %v1623, 1
      %v1801 = vsel %vm449, %v1799, %v1800
      %v1802 = vrot.slane %v1624, 1
      %v1803 = vrot.slane %v1625, 1
      %v1804 = vsel %vm449, %v1802, %v1803
      %v1837 = vsel %vm449, %v1758, 0.0
      %v1838 = vsel %vm449, %v1761, 0.0
      %v1839 = vsel %vm449, %v1764, 0.0
      %v1840 = vsel %vm449, %v1767, 0.0
      %v1841 = vsel %vm449, %v1770, 0.0
      %v1842 = vsel %vm449, %v1773, 0.0
      %v1843 = vsel %vm449, %v1776, 0.0
      %v1844 = vsel %vm449, %v1779, 0.0
      %v1845 = vsel %vm449, %v1782, 0.0
      %v1846 = vsel %vm449, %v1785, 0.0
      %v1847 = vsel %vm449, %v1788, 0.0
      %v1848 = vsel %vm449, %v1791, 0.0
      %v1849 = vsel %vm449, %v1794, 0.0
      %v1850 = vsel %vm449, %v1797, 0.0
      %v1851 = vsel %vm449, %v1800, 0.0
      %v1852 = vsel %vm449, %v1803, 0.0
      %v1853 = vlaneseq
      %v1854 = vshrl.u32 %v1853, 7
      %v1855 = vsub.s32 1, %v1854
      %v1856 = vrot.slane %v1627, %v1855
      %v1857 = vmul.f32 %v1594, %v1856
      %v1858 = vmul.f32 %v1595, %v1856
      %v1859 = vmul.f32 %v1596, %v1856
      %v1860 = vmul.f32 %v1597, %v1856
      %v1861 = vmul.f32 %v1598, %v1856
      %v1862 = vmul.f32 %v1599, %v1856
      %v1863 = vmul.f32 %v1600, %v1856
      %v1864 = vmul.f32 %v1601, %v1856
      %v1865 = vmul.f32 %v1602, %v1856
      %v1866 = vmul.f32 %v1603, %v1856
      %v1867 = vmul.f32 %v1604, %v1856
      %v1868 = vmul.f32 %v1605, %v1856
      %v1869 = vmul.f32 %v1606, %v1856
      %v1870 = vmul.f32 %v1607, %v1856
      %v1871 = vmul.f32 %v1608, %v1856
      %v1872 = vmul.f32 %v1609, %v1856
      %v1873 = vmul.f32 %v1610, %v1856
      %v1874 = vmul.f32 %v1611, %v1856
      %v1875 = vmul.f32 %v1612, %v1856
      %v1876 = vmul.f32 %v1613, %v1856
      %v1877 = vmul.f32 %v1614, %v1856
      %v1878 = vmul.f32 %v1615, %v1856
      %v1879 = vmul.f32 %v1616, %v1856
      %v1880 = vmul.f32 %v1617, %v1856
      %v1881 = vmul.f32 %v1618, %v1856
      %v1882 = vmul.f32 %v1619, %v1856
      %v1883 = vmul.f32 %v1620, %v1856
      %v1884 = vmul.f32 %v1621, %v1856
      %v1885 = vmul.f32 %v1622, %v1856
      %v1886 = vmul.f32 %v1623, %v1856
      %v1887 = vmul.f32 %v1624, %v1856
      %v1888 = vmul.f32 %v1625, %v1856
      %v1889 = vlaneseq
      %v1890 = vshrl.u32 %v1889, 7
      %v1891 = vsub.s32 0, %v1890
      %v1892 = vrot.slane %v1626, %v1891
      %v1893 = vmul.f32 %v432, %v1892
      %v1894 = vmul.f32 %v349, %v1892
      %v1895 = vmul.f32 %v1741, %v1892
      %v1896 = vmul.f32 %v1663, %v1892
      %v1897 = vmul.f32 %v1742, %v1892
      %v1898 = vmul.f32 %v1666, %v1892
      %v1899 = vmul.f32 %v1743, %v1892
      %v1900 = vmul.f32 %v1669, %v1892
      %v1901 = vmul.f32 %v1744, %v1892
      %v1902 = vmul.f32 %v1672, %v1892
      %v1903 = vmul.f32 %v1745, %v1892
      %v1904 = vmul.f32 %v1675, %v1892
      %v1905 = vmul.f32 %v1746, %v1892
      %v1906 = vmul.f32 %v1678, %v1892
      %v1907 = vmul.f32 %v1747, %v1892
      %v1908 = vmul.f32 %v1681, %v1892
      %v1909 = vmul.f32 %v1748, %v1892
      %v1910 = vmul.f32 %v1684, %v1892
      %v1911 = vmul.f32 %v1749, %v1892
      %v1912 = vmul.f32 %v1687, %v1892
      %v1913 = vmul.f32 %v1750, %v1892
      %v1914 = vmul.f32 %v1690, %v1892
      %v1915 = vmul.f32 %v1751, %v1892
      %v1916 = vmul.f32 %v1693, %v1892
      %v1917 = vmul.f32 %v1752, %v1892
      %v1918 = vmul.f32 %v1696, %v1892
      %v1919 = vmul.f32 %v1753, %v1892
      %v1920 = vmul.f32 %v1699, %v1892
      %v1921 = vmul.f32 %v1754, %v1892
      %v1922 = vmul.f32 %v1702, %v1892
      %v1923 = vmul.f32 %v1755, %v1892
      %v1924 = vmul.f32 %v1705, %v1892
      %v1925 = vadd.f32 %v1857, %v1893
      %v1926 = vadd.f32 %v1858, %v1894
      %v1927 = vadd.f32 %v1859, %v1895
      %v1928 = vadd.f32 %v1860, %v1896
      %v1929 = vadd.f32 %v1861, %v1897
      %v1930 = vadd.f32 %v1862, %v1898
      %v1931 = vadd.f32 %v1863, %v1899
      %v1932 = vadd.f32 %v1864, %v1900
      %v1933 = vadd.f32 %v1865, %v1901
      %v1934 = vadd.f32 %v1866, %v1902
      %v1935 = vadd.f32 %v1867, %v1903
      %v1936 = vadd.f32 %v1868, %v1904
      %v1937 = vadd.f32 %v1869, %v1905
      %v1938 = vadd.f32 %v1870, %v1906
      %v1939 = vadd.f32 %v1871, %v1907
      %v1940 = vadd.f32 %v1872, %v1908
      %v1941 = vadd.f32 %v1873, %v1909
      %v1942 = vadd.f32 %v1874, %v1910
      %v1943 = vadd.f32 %v1875, %v1911
      %v1944 = vadd.f32 %v1876, %v1912
      %v1945 = vadd.f32 %v1877, %v1913
      %v1946 = vadd.f32 %v1878, %v1914
      %v1947 = vadd.f32 %v1879, %v1915
      %v1948 = vadd.f32 %v1880, %v1916
      %v1949 = vadd.f32 %v1881, %v1917
      %v1950 = vadd.f32 %v1882, %v1918
      %v1951 = vadd.f32 %v1883, %v1919
      %v1952 = vadd.f32 %v1884, %v1920
      %v1953 = vadd.f32 %v1885, %v1921
      %v1954 = vadd.f32 %v1886, %v1922
      %v1955 = vadd.f32 %v1887, %v1923
      %v1956 = vadd.f32 %v1888, %v1924
      %v1957 = vlaneseq
      %v1958 = vshrl.u32 %v1957, 7
      %v1959 = vsub.s32 1, %v1958
      %v1960 = vrot.slane %v1626, %v1959
      %v1961 = vmul.f32 %v1960, 0.0
      %v1962 = vmul.f32 %v1594, %v1960
      %v1963 = vmul.f32 %v1595, %v1960
      %v1964 = vmul.f32 %v1596, %v1960
      %v1965 = vmul.f32 %v1597, %v1960
      %v1966 = vmul.f32 %v1598, %v1960
      %v1967 = vmul.f32 %v1599, %v1960
      %v1968 = vmul.f32 %v1600, %v1960
      %v1969 = vmul.f32 %v1601, %v1960
      %v1970 = vmul.f32 %v1602, %v1960
      %v1971 = vmul.f32 %v1603, %v1960
      %v1972 = vmul.f32 %v1604, %v1960
      %v1973 = vmul.f32 %v1605, %v1960
      %v1974 = vmul.f32 %v1606, %v1960
      %v1975 = vmul.f32 %v1607, %v1960
      %v1976 = vmul.f32 %v1608, %v1960
      %v1977 = vmul.f32 %v1609, %v1960
      %v1978 = vmul.f32 %v1610, %v1960
      %v1979 = vmul.f32 %v1611, %v1960
      %v1980 = vmul.f32 %v1612, %v1960
      %v1981 = vmul.f32 %v1613, %v1960
      %v1982 = vmul.f32 %v1614, %v1960
      %v1983 = vmul.f32 %v1615, %v1960
      %v1984 = vmul.f32 %v1616, %v1960
      %v1985 = vmul.f32 %v1617, %v1960
      %v1986 = vmul.f32 %v1618, %v1960
      %v1987 = vmul.f32 %v1619, %v1960
      %v1988 = vmul.f32 %v1620, %v1960
      %v1989 = vmul.f32 %v1621, %v1960
      %v1990 = vmul.f32 %v1622, %v1960
      %v1991 = vmul.f32 %v1623, %v1960
      %v1992 = vadd.f32 %v1925, %v1961
      %v1993 = vadd.f32 %v1926, %v1961
      %v1994 = vadd.f32 %v1927, %v1962
      %v1995 = vadd.f32 %v1928, %v1963
      %v1996 = vadd.f32 %v1929, %v1964
      %v1997 = vadd.f32 %v1930, %v1965
      %v1998 = vadd.f32 %v1931, %v1966
      %v1999 = vadd.f32 %v1932, %v1967
      %v2000 = vadd.f32 %v1933, %v1968
      %v2001 = vadd.f32 %v1934, %v1969
      %v2002 = vadd.f32 %v1935, %v1970
      %v2003 = vadd.f32 %v1936, %v1971
      %v2004 = vadd.f32 %v1937, %v1972
      %v2005 = vadd.f32 %v1938, %v1973
      %v2006 = vadd.f32 %v1939, %v1974
      %v2007 = vadd.f32 %v1940, %v1975
      %v2008 = vadd.f32 %v1941, %v1976
      %v2009 = vadd.f32 %v1942, %v1977
      %v2010 = vadd.f32 %v1943, %v1978
      %v2011 = vadd.f32 %v1944, %v1979
      %v2012 = vadd.f32 %v1945, %v1980
      %v2013 = vadd.f32 %v1946, %v1981
      %v2014 = vadd.f32 %v1947, %v1982
      %v2015 = vadd.f32 %v1948, %v1983
      %v2016 = vadd.f32 %v1949, %v1984
      %v2017 = vadd.f32 %v1950, %v1985
      %v2018 = vadd.f32 %v1951, %v1986
      %v2019 = vadd.f32 %v1952, %v1987
      %v2020 = vadd.f32 %v1953, %v1988
      %v2021 = vadd.f32 %v1954, %v1989
      %v2022 = vadd.f32 %v1955, %v1990
      %v2023 = vadd.f32 %v1956, %v1991
      %v2024 = vlaneseq
      %v2025 = vshrl.u32 %v2024, 7
      %v2026 = vsub.s32 2, %v2025
      %v2027 = vrot.slane %v1626, %v2026
      %v2028 = vmul.f32 %v451, %v2027
      %v2029 = vmul.f32 %v534, %v2027
      %v2030 = vmul.f32 %v1759, %v2027
      %v2031 = vmul.f32 %v1837, %v2027
      %v2032 = vmul.f32 %v1762, %v2027
      %v2033 = vmul.f32 %v1838, %v2027
      %v2034 = vmul.f32 %v1765, %v2027
      %v2035 = vmul.f32 %v1839, %v2027
      %v2036 = vmul.f32 %v1768, %v2027
      %v2037 = vmul.f32 %v1840, %v2027
      %v2038 = vmul.f32 %v1771, %v2027
      %v2039 = vmul.f32 %v1841, %v2027
      %v2040 = vmul.f32 %v1774, %v2027
      %v2041 = vmul.f32 %v1842, %v2027
      %v2042 = vmul.f32 %v1777, %v2027
      %v2043 = vmul.f32 %v1843, %v2027
      %v2044 = vmul.f32 %v1780, %v2027
      %v2045 = vmul.f32 %v1844, %v2027
      %v2046 = vmul.f32 %v1783, %v2027
      %v2047 = vmul.f32 %v1845, %v2027
      %v2048 = vmul.f32 %v1786, %v2027
      %v2049 = vmul.f32 %v1846, %v2027
      %v2050 = vmul.f32 %v1789, %v2027
      %v2051 = vmul.f32 %v1847, %v2027
      %v2052 = vmul.f32 %v1792, %v2027
      %v2053 = vmul.f32 %v1848, %v2027
      %v2054 = vmul.f32 %v1795, %v2027
      %v2055 = vmul.f32 %v1849, %v2027
      %v2056 = vmul.f32 %v1798, %v2027
      %v2057 = vmul.f32 %v1850, %v2027
      %v2058 = vmul.f32 %v1801, %v2027
      %v2059 = vmul.f32 %v1851, %v2027
      %v2060 = vadd.f32 %v1992, %v2028
      %v2061 = vadd.f32 %v1993, %v2029
      %v2062 = vadd.f32 %v1994, %v2030
      %v2063 = vadd.f32 %v1995, %v2031
      %v2064 = vadd.f32 %v1996, %v2032
      %v2065 = vadd.f32 %v1997, %v2033
      %v2066 = vadd.f32 %v1998, %v2034
      %v2067 = vadd.f32 %v1999, %v2035
      %v2068 = vadd.f32 %v2000, %v2036
      %v2069 = vadd.f32 %v2001, %v2037
      %v2070 = vadd.f32 %v2002, %v2038
      %v2071 = vadd.f32 %v2003, %v2039
      %v2072 = vadd.f32 %v2004, %v2040
      %v2073 = vadd.f32 %v2005, %v2041
      %v2074 = vadd.f32 %v2006, %v2042
      %v2075 = vadd.f32 %v2007, %v2043
      %v2076 = vadd.f32 %v2008, %v2044
      %v2077 = vadd.f32 %v2009, %v2045
      %v2078 = vadd.f32 %v2010, %v2046
      %v2079 = vadd.f32 %v2011, %v2047
      %v2080 = vadd.f32 %v2012, %v2048
      %v2081 = vadd.f32 %v2013, %v2049
      %v2082 = vadd.f32 %v2014, %v2050
      %v2083 = vadd.f32 %v2015, %v2051
      %v2084 = vadd.f32 %v2016, %v2052
      %v2085 = vadd.f32 %v2017, %v2053
      %v2086 = vadd.f32 %v2018, %v2054
      %v2087 = vadd.f32 %v2019, %v2055
      %v2088 = vadd.f32 %v2020, %v2056
      %v2089 = vadd.f32 %v2021, %v2057
      %v2090 = vadd.f32 %v2022, %v2058
      %v2091 = vadd.f32 %v2023, %v2059
      %v2092 = vlaneseq
      %v2093 = vshrl.u32 %v2092, 7
      %v2094 = vsub.s32 0, %v2093
      %v2095 = vrot.slane %v1627, %v2094
      %v2096 = vmul.f32 %v1741, %v2095
      %v2097 = vmul.f32 %v1663, %v2095
      %v2098 = vmul.f32 %v1742, %v2095
      %v2099 = vmul.f32 %v1666, %v2095
      %v2100 = vmul.f32 %v1743, %v2095
      %v2101 = vmul.f32 %v1669, %v2095
      %v2102 = vmul.f32 %v1744, %v2095
      %v2103 = vmul.f32 %v1672, %v2095
      %v2104 = vmul.f32 %v1745, %v2095
      %v2105 = vmul.f32 %v1675, %v2095
      %v2106 = vmul.f32 %v1746, %v2095
      %v2107 = vmul.f32 %v1678, %v2095
      %v2108 = vmul.f32 %v1747, %v2095
      %v2109 = vmul.f32 %v1681, %v2095
      %v2110 = vmul.f32 %v1748, %v2095
      %v2111 = vmul.f32 %v1684, %v2095
      %v2112 = vmul.f32 %v1749, %v2095
      %v2113 = vmul.f32 %v1687, %v2095
      %v2114 = vmul.f32 %v1750, %v2095
      %v2115 = vmul.f32 %v1690, %v2095
      %v2116 = vmul.f32 %v1751, %v2095
      %v2117 = vmul.f32 %v1693, %v2095
      %v2118 = vmul.f32 %v1752, %v2095
      %v2119 = vmul.f32 %v1696, %v2095
      %v2120 = vmul.f32 %v1753, %v2095
      %v2121 = vmul.f32 %v1699, %v2095
      %v2122 = vmul.f32 %v1754, %v2095
      %v2123 = vmul.f32 %v1702, %v2095
      %v2124 = vmul.f32 %v1755, %v2095
      %v2125 = vmul.f32 %v1705, %v2095
      %v2126 = vmul.f32 %v1756, %v2095
      %v2127 = vmul.f32 %v1708, %v2095
      %v2128 = vadd.f32 %v2060, %v2096
      %v2129 = vadd.f32 %v2061, %v2097
      %v2130 = vadd.f32 %v2062, %v2098
      %v2131 = vadd.f32 %v2063, %v2099
      %v2132 = vadd.f32 %v2064, %v2100
      %v2133 = vadd.f32 %v2065, %v2101
      %v2134 = vadd.f32 %v2066, %v2102
      %v2135 = vadd.f32 %v2067, %v2103
      %v2136 = vadd.f32 %v2068, %v2104
      %v2137 = vadd.f32 %v2069, %v2105
      %v2138 = vadd.f32 %v2070, %v2106
      %v2139 = vadd.f32 %v2071, %v2107
      %v2140 = vadd.f32 %v2072, %v2108
      %v2141 = vadd.f32 %v2073, %v2109
      %v2142 = vadd.f32 %v2074, %v2110
      %v2143 = vadd.f32 %v2075, %v2111
      %v2144 = vadd.f32 %v2076, %v2112
      %v2145 = vadd.f32 %v2077, %v2113
      %v2146 = vadd.f32 %v2078, %v2114
      %v2147 = vadd.f32 %v2079, %v2115
      %v2148 = vadd.f32 %v2080, %v2116
      %v2149 = vadd.f32 %v2081, %v2117
      %v2150 = vadd.f32 %v2082, %v2118
      %v2151 = vadd.f32 %v2083, %v2119
      %v2152 = vadd.f32 %v2084, %v2120
      %v2153 = vadd.f32 %v2085, %v2121
      %v2154 = vadd.f32 %v2086, %v2122
      %v2155 = vadd.f32 %v2087, %v2123
      %v2156 = vadd.f32 %v2088, %v2124
      %v2157 = vadd.f32 %v2089, %v2125
      %v2158 = vadd.f32 %v2090, %v2126
      %v2159 = vadd.f32 %v2091, %v2127
      %v2160 = vlaneseq
      %v2161 = vshrl.u32 %v2160, 7
      %v2162 = vsub.s32 2, %v2161
      %v2163 = vrot.slane %v1627, %v2162
      %v2164 = vmul.f32 %v1759, %v2163
      %v2165 = vmul.f32 %v1837, %v2163
      %v2166 = vmul.f32 %v1762, %v2163
      %v2167 = vmul.f32 %v1838, %v2163
      %v2168 = vmul.f32 %v1765, %v2163
      %v2169 = vmul.f32 %v1839, %v2163
      %v2170 = vmul.f32 %v1768, %v2163
      %v2171 = vmul.f32 %v1840, %v2163
      %v2172 = vmul.f32 %v1771, %v2163
      %v2173 = vmul.f32 %v1841, %v2163
      %v2174 = vmul.f32 %v1774, %v2163
      %v2175 = vmul.f32 %v1842, %v2163
      %v2176 = vmul.f32 %v1777, %v2163
      %v2177 = vmul.f32 %v1843, %v2163
      %v2178 = vmul.f32 %v1780, %v2163
      %v2179 = vmul.f32 %v1844, %v2163
      %v2180 = vmul.f32 %v1783, %v2163
      %v2181 = vmul.f32 %v1845, %v2163
      %v2182 = vmul.f32 %v1786, %v2163
      %v2183 = vmul.f32 %v1846, %v2163
      %v2184 = vmul.f32 %v1789, %v2163
      %v2185 = vmul.f32 %v1847, %v2163
      %v2186 = vmul.f32 %v1792, %v2163
      %v2187 = vmul.f32 %v1848, %v2163
      %v2188 = vmul.f32 %v1795, %v2163
      %v2189 = vmul.f32 %v1849, %v2163
      %v2190 = vmul.f32 %v1798, %v2163
      %v2191 = vmul.f32 %v1850, %v2163
      %v2192 = vmul.f32 %v1801, %v2163
      %v2193 = vmul.f32 %v1851, %v2163
      %v2194 = vmul.f32 %v1804, %v2163
      %v2195 = vmul.f32 %v1852, %v2163
      %v2196 = vadd.f32 %v2128, %v2164
      %v2197 = vadd.f32 %v2129, %v2165
      %v2198 = vadd.f32 %v2130, %v2166
      %v2199 = vadd.f32 %v2131, %v2167
      %v2200 = vadd.f32 %v2132, %v2168
      %v2201 = vadd.f32 %v2133, %v2169
      %v2202 = vadd.f32 %v2134, %v2170
      %v2203 = vadd.f32 %v2135, %v2171
      %v2204 = vadd.f32 %v2136, %v2172
      %v2205 = vadd.f32 %v2137, %v2173
      %v2206 = vadd.f32 %v2138, %v2174
      %v2207 = vadd.f32 %v2139, %v2175
      %v2208 = vadd.f32 %v2140, %v2176
      %v2209 = vadd.f32 %v2141, %v2177
      %v2210 = vadd.f32 %v2142, %v2178
      %v2211 = vadd.f32 %v2143, %v2179
      %v2212 = vadd.f32 %v2144, %v2180
      %v2213 = vadd.f32 %v2145, %v2181
      %v2214 = vadd.f32 %v2146, %v2182
      %v2215 = vadd.f32 %v2147, %v2183
      %v2216 = vadd.f32 %v2148, %v2184
      %v2217 = vadd.f32 %v2149, %v2185
      %v2218 = vadd.f32 %v2150, %v2186
      %v2219 = vadd.f32 %v2151, %v2187
      %v2220 = vadd.f32 %v2152, %v2188
      %v2221 = vadd.f32 %v2153, %v2189
      %v2222 = vadd.f32 %v2154, %v2190
      %v2223 = vadd.f32 %v2155, %v2191
      %v2224 = vadd.f32 %v2156, %v2192
      %v2225 = vadd.f32 %v2157, %v2193
      %v2226 = vadd.f32 %v2158, %v2194
      %v2227 = vadd.f32 %v2159, %v2195
      %v2228 = vlaneseq
      %v2229 = vshrl.u32 %v2228, 7
      %v2230 = vsub.s32 0, %v2229
      %v2231 = vrot.slane %v1628, %v2230
      %v2232 = vmul.f32 %v1742, %v2231
      %v2233 = vmul.f32 %v1666, %v2231
      %v2234 = vmul.f32 %v1743, %v2231
      %v2235 = vmul.f32 %v1669, %v2231
      %v2236 = vmul.f32 %v1744, %v2231
      %v2237 = vmul.f32 %v1672, %v2231
      %v2238 = vmul.f32 %v1745, %v2231
      %v2239 = vmul.f32 %v1675, %v2231
      %v2240 = vmul.f32 %v1746, %v2231
      %v2241 = vmul.f32 %v1678, %v2231
      %v2242 = vmul.f32 %v1747, %v2231
      %v2243 = vmul.f32 %v1681, %v2231
      %v2244 = vmul.f32 %v1748, %v2231
      %v2245 = vmul.f32 %v1684, %v2231
      %v2246 = vmul.f32 %v1749, %v2231
      %v2247 = vmul.f32 %v1687, %v2231
      %v2248 = vmul.f32 %v1750, %v2231
      %v2249 = vmul.f32 %v1690, %v2231
      %v2250 = vmul.f32 %v1751, %v2231
      %v2251 = vmul.f32 %v1693, %v2231
      %v2252 = vmul.f32 %v1752, %v2231
      %v2253 = vmul.f32 %v1696, %v2231
      %v2254 = vmul.f32 %v1753, %v2231
      %v2255 = vmul.f32 %v1699, %v2231
      %v2256 = vmul.f32 %v1754, %v2231
      %v2257 = vmul.f32 %v1702, %v2231
      %v2258 = vmul.f32 %v1755, %v2231
      %v2259 = vmul.f32 %v1705, %v2231
      %v2260 = vmul.f32 %v1756, %v2231
      %v2261 = vmul.f32 %v1708, %v2231
      %v2262 = vmul.f32 %v432, %v2231
      %v2263 = vmul.f32 %v349, %v2231
      %v2264 = vadd.f32 %v2196, %v2232
      %v2265 = vadd.f32 %v2197, %v2233
      %v2266 = vadd.f32 %v2198, %v2234
      %v2267 = vadd.f32 %v2199, %v2235
      %v2268 = vadd.f32 %v2200, %v2236
      %v2269 = vadd.f32 %v2201, %v2237
      %v2270 = vadd.f32 %v2202, %v2238
      %v2271 = vadd.f32 %v2203, %v2239
      %v2272 = vadd.f32 %v2204, %v2240
      %v2273 = vadd.f32 %v2205, %v2241
      %v2274 = vadd.f32 %v2206, %v2242
      %v2275 = vadd.f32 %v2207, %v2243
      %v2276 = vadd.f32 %v2208, %v2244
      %v2277 = vadd.f32 %v2209, %v2245
      %v2278 = vadd.f32 %v2210, %v2246
      %v2279 = vadd.f32 %v2211, %v2247
      %v2280 = vadd.f32 %v2212, %v2248
      %v2281 = vadd.f32 %v2213, %v2249
      %v2282 = vadd.f32 %v2214, %v2250
      %v2283 = vadd.f32 %v2215, %v2251
      %v2284 = vadd.f32 %v2216, %v2252
      %v2285 = vadd.f32 %v2217, %v2253
      %v2286 = vadd.f32 %v2218, %v2254
      %v2287 = vadd.f32 %v2219, %v2255
      %v2288 = vadd.f32 %v2220, %v2256
      %v2289 = vadd.f32 %v2221, %v2257
      %v2290 = vadd.f32 %v2222, %v2258
      %v2291 = vadd.f32 %v2223, %v2259
      %v2292 = vadd.f32 %v2224, %v2260
      %v2293 = vadd.f32 %v2225, %v2261
      %v2294 = vadd.f32 %v2226, %v2262
      %v2295 = vadd.f32 %v2227, %v2263
      %v2296 = vlaneseq
      %v2297 = vshrl.u32 %v2296, 7
      %v2298 = vsub.s32 1, %v2297
      %v2299 = vrot.slane %v1628, %v2298
      %v2300 = vmul.f32 %v1596, %v2299
      %v2301 = vmul.f32 %v1597, %v2299
      %v2302 = vmul.f32 %v1598, %v2299
      %v2303 = vmul.f32 %v1599, %v2299
      %v2304 = vmul.f32 %v1600, %v2299
      %v2305 = vmul.f32 %v1601, %v2299
      %v2306 = vmul.f32 %v1602, %v2299
      %v2307 = vmul.f32 %v1603, %v2299
      %v2308 = vmul.f32 %v1604, %v2299
      %v2309 = vmul.f32 %v1605, %v2299
      %v2310 = vmul.f32 %v1606, %v2299
      %v2311 = vmul.f32 %v1607, %v2299
      %v2312 = vmul.f32 %v1608, %v2299
      %v2313 = vmul.f32 %v1609, %v2299
      %v2314 = vmul.f32 %v1610, %v2299
      %v2315 = vmul.f32 %v1611, %v2299
      %v2316 = vmul.f32 %v1612, %v2299
      %v2317 = vmul.f32 %v1613, %v2299
      %v2318 = vmul.f32 %v1614, %v2299
      %v2319 = vmul.f32 %v1615, %v2299
      %v2320 = vmul.f32 %v1616, %v2299
      %v2321 = vmul.f32 %v1617, %v2299
      %v2322 = vmul.f32 %v1618, %v2299
      %v2323 = vmul.f32 %v1619, %v2299
      %v2324 = vmul.f32 %v1620, %v2299
      %v2325 = vmul.f32 %v1621, %v2299
      %v2326 = vmul.f32 %v1622, %v2299
      %v2327 = vmul.f32 %v1623, %v2299
      %v2328 = vmul.f32 %v1624, %v2299
      %v2329 = vmul.f32 %v1625, %v2299
      %v2330 = vmul.f32 %v2299, 0.0
      %v2331 = vadd.f32 %v2264, %v2300
      %v2332 = vadd.f32 %v2265, %v2301
      %v2333 = vadd.f32 %v2266, %v2302
      %v2334 = vadd.f32 %v2267, %v2303
      %v2335 = vadd.f32 %v2268, %v2304
      %v2336 = vadd.f32 %v2269, %v2305
      %v2337 = vadd.f32 %v2270, %v2306
      %v2338 = vadd.f32 %v2271, %v2307
      %v2339 = vadd.f32 %v2272, %v2308
      %v2340 = vadd.f32 %v2273, %v2309
      %v2341 = vadd.f32 %v2274, %v2310
      %v2342 = vadd.f32 %v2275, %v2311
      %v2343 = vadd.f32 %v2276, %v2312
      %v2344 = vadd.f32 %v2277, %v2313
      %v2345 = vadd.f32 %v2278, %v2314
      %v2346 = vadd.f32 %v2279, %v2315
      %v2347 = vadd.f32 %v2280, %v2316
      %v2348 = vadd.f32 %v2281, %v2317
      %v2349 = vadd.f32 %v2282, %v2318
      %v2350 = vadd.f32 %v2283, %v2319
      %v2351 = vadd.f32 %v2284, %v2320
      %v2352 = vadd.f32 %v2285, %v2321
      %v2353 = vadd.f32 %v2286, %v2322
      %v2354 = vadd.f32 %v2287, %v2323
      %v2355 = vadd.f32 %v2288, %v2324
      %v2356 = vadd.f32 %v2289, %v2325
      %v2357 = vadd.f32 %v2290, %v2326
      %v2358 = vadd.f32 %v2291, %v2327
      %v2359 = vadd.f32 %v2292, %v2328
      %v2360 = vadd.f32 %v2293, %v2329
      %v2361 = vadd.f32 %v2294, %v2330
      %v2362 = vadd.f32 %v2295, %v2330
      %v2363 = vlaneseq
      %v2364 = vshrl.u32 %v2363, 7
      %v2365 = vsub.s32 2, %v2364
      %v2366 = vrot.slane %v1628, %v2365
      %v2367 = vmul.f32 %v1762, %v2366
      %v2368 = vmul.f32 %v1838, %v2366
      %v2369 = vmul.f32 %v1765, %v2366
      %v2370 = vmul.f32 %v1839, %v2366
      %v2371 = vmul.f32 %v1768, %v2366
      %v2372 = vmul.f32 %v1840, %v2366
      %v2373 = vmul.f32 %v1771, %v2366
      %v2374 = vmul.f32 %v1841, %v2366
      %v2375 = vmul.f32 %v1774, %v2366
      %v2376 = vmul.f32 %v1842, %v2366
      %v2377 = vmul.f32 %v1777, %v2366
      %v2378 = vmul.f32 %v1843, %v2366
      %v2379 = vmul.f32 %v1780, %v2366
      %v2380 = vmul.f32 %v1844, %v2366
      %v2381 = vmul.f32 %v1783, %v2366
      %v2382 = vmul.f32 %v1845, %v2366
      %v2383 = vmul.f32 %v1786, %v2366
      %v2384 = vmul.f32 %v1846, %v2366
      %v2385 = vmul.f32 %v1789, %v2366
      %v2386 = vmul.f32 %v1847, %v2366
      %v2387 = vmul.f32 %v1792, %v2366
      %v2388 = vmul.f32 %v1848, %v2366
      %v2389 = vmul.f32 %v1795, %v2366
      %v2390 = vmul.f32 %v1849, %v2366
      %v2391 = vmul.f32 %v1798, %v2366
      %v2392 = vmul.f32 %v1850, %v2366
      %v2393 = vmul.f32 %v1801, %v2366
      %v2394 = vmul.f32 %v1851, %v2366
      %v2395 = vmul.f32 %v1804, %v2366
      %v2396 = vmul.f32 %v1852, %v2366
      %v2397 = vmul.f32 %v451, %v2366
      %v2398 = vmul.f32 %v534, %v2366
      %v2399 = vadd.f32 %v2331, %v2367
      %v2400 = vadd.f32 %v2332, %v2368
      %v2401 = vadd.f32 %v2333, %v2369
      %v2402 = vadd.f32 %v2334, %v2370
      %v2403 = vadd.f32 %v2335, %v2371
      %v2404 = vadd.f32 %v2336, %v2372
      %v2405 = vadd.f32 %v2337, %v2373
      %v2406 = vadd.f32 %v2338, %v2374
      %v2407 = vadd.f32 %v2339, %v2375
      %v2408 = vadd.f32 %v2340, %v2376
      %v2409 = vadd.f32 %v2341, %v2377
      %v2410 = vadd.f32 %v2342, %v2378
      %v2411 = vadd.f32 %v2343, %v2379
      %v2412 = vadd.f32 %v2344, %v2380
      %v2413 = vadd.f32 %v2345, %v2381
      %v2414 = vadd.f32 %v2346, %v2382
      %v2415 = vadd.f32 %v2347, %v2383
      %v2416 = vadd.f32 %v2348, %v2384
      %v2417 = vadd.f32 %v2349, %v2385
      %v2418 = vadd.f32 %v2350, %v2386
      %v2419 = vadd.f32 %v2351, %v2387
      %v2420 = vadd.f32 %v2352, %v2388
      %v2421 = vadd.f32 %v2353, %v2389
      %v2422 = vadd.f32 %v2354, %v2390
      %v2423 = vadd.f32 %v2355, %v2391
      %v2424 = vadd.f32 %v2356, %v2392
      %v2425 = vadd.f32 %v2357, %v2393
      %v2426 = vadd.f32 %v2358, %v2394
      %v2427 = vadd.f32 %v2359, %v2395
      %v2428 = vadd.f32 %v2360, %v2396
      %v2429 = vadd.f32 %v2361, %v2397
      %v2430 = vadd.f32 %v2362, %v2398
      %v2431 = vld [vmem:[%s6] sm:$0x1]
      %v2433 = vlaneseq
      %v2434 = vshrl.u32 %v2433, 7
      %v2435 = vsub.s32 0, %v2434
      %v2436 = vrot.slane %v2431, %v2435
      %v2438 = vadd.f32 %v2399, %v2436
      %v2439 = vadd.f32 %v2400, %v2436
      %v2440 = vadd.f32 %v2401, %v2436
      %v2441 = vadd.f32 %v2402, %v2436
      %v2442 = vadd.f32 %v2403, %v2436
      %v2443 = vadd.f32 %v2404, %v2436
      %v2444 = vadd.f32 %v2405, %v2436
      %v2445 = vadd.f32 %v2406, %v2436
      %v2446 = vadd.f32 %v2407, %v2436
      %v2447 = vadd.f32 %v2408, %v2436
      %v2448 = vadd.f32 %v2409, %v2436
      %v2449 = vadd.f32 %v2410, %v2436
      %v2450 = vadd.f32 %v2411, %v2436
      %v2451 = vadd.f32 %v2412, %v2436
      %v2452 = vadd.f32 %v2413, %v2436
      %v2453 = vadd.f32 %v2414, %v2436
      %v2454 = vadd.f32 %v2415, %v2436
      %v2455 = vadd.f32 %v2416, %v2436
      %v2456 = vadd.f32 %v2417, %v2436
      %v2457 = vadd.f32 %v2418, %v2436
      %v2458 = vadd.f32 %v2419, %v2436
      %v2459 = vadd.f32 %v2420, %v2436
      %v2460 = vadd.f32 %v2421, %v2436
      %v2461 = vadd.f32 %v2422, %v2436
      %v2462 = vadd.f32 %v2423, %v2436
      %v2463 = vadd.f32 %v2424, %v2436
      %v2464 = vadd.f32 %v2425, %v2436
      %v2465 = vadd.f32 %v2426, %v2436
      %v2466 = vadd.f32 %v2427, %v2436
      %v2467 = vadd.f32 %v2428, %v2436
      %v2468 = vadd.f32 %v2429, %v2436
      %v2469 = vadd.f32 %v2430, %v2436
      %v2470 = vadd.f32 %v2438, %v279
      %v2471 = vadd.f32 %v2439, %v280
      %v2472 = vadd.f32 %v2440, %v281
      %v2473 = vadd.f32 %v2441, %v282
      %v2474 = vadd.f32 %v2442, %v283
      %v2475 = vadd.f32 %v2443, %v284
      %v2476 = vadd.f32 %v2444, %v285
      %v2477 = vadd.f32 %v2445, %v286
      %v2478 = vadd.f32 %v2446, %v287
      %v2479 = vadd.f32 %v2447, %v288
      %v2480 = vadd.f32 %v2448, %v289
      %v2481 = vadd.f32 %v2449, %v290
      %v2482 = vadd.f32 %v2450, %v291
      %v2483 = vadd.f32 %v2451, %v292
      %v2484 = vadd.f32 %v2452, %v293
      %v2485 = vadd.f32 %v2453, %v294
      %v2486 = vadd.f32 %v2454, %v295
      %v2487 = vadd.f32 %v2455, %v296
      %v2488 = vadd.f32 %v2456, %v297
      %v2489 = vadd.f32 %v2457, %v298
      %v2490 = vadd.f32 %v2458, %v299
      %v2491 = vadd.f32 %v2459, %v300
      %v2492 = vadd.f32 %v2460, %v301
      %v2493 = vadd.f32 %v2461, %v302
      %v2494 = vadd.f32 %v2462, %v303
      %v2495 = vadd.f32 %v2463, %v304
      %v2496 = vadd.f32 %v2464, %v305
      %v2497 = vadd.f32 %v2465, %v306
      %v2498 = vadd.f32 %v2466, %v307
      %v2499 = vadd.f32 %v2467, %v308
      %v2500 = vadd.f32 %v2468, %v309
      %v2501 = vadd.f32 %v2469, %v310
      %2502 = vst.msk [vmem:[%s278] sm:$0xff] %vm1240, %v2470
      %2503 = vst.msk [vmem:[%s278 + $0x8] sm:$0xff] %vm1240, %v2471
      %2504 = vst.msk [vmem:[%s278 + $0x10] sm:$0xff] %vm1240, %v2472
      %2505 = vst.msk [vmem:[%s278 + $0x18] sm:$0xff] %vm1240, %v2473
      %2506 = vst.msk [vmem:[%s278 + $0x20] sm:$0xff] %vm1240, %v2474
      %2507 = vst.msk [vmem:[%s278 + $0x28] sm:$0xff] %vm1240, %v2475
      %2508 = vst.msk [vmem:[%s278 + $0x30] sm:$0xff] %vm1240, %v2476
      %2509 = vst.msk [vmem:[%s278 + $0x38] sm:$0xff] %vm1240, %v2477
      %2510 = vst.msk [vmem:[%s278 + $0x40] sm:$0xff] %vm1240, %v2478
      %2511 = vst.msk [vmem:[%s278 + $0x48] sm:$0xff] %vm1240, %v2479
      %2512 = vst.msk [vmem:[%s278 + $0x50] sm:$0xff] %vm1240, %v2480
      %2513 = vst.msk [vmem:[%s278 + $0x58] sm:$0xff] %vm1240, %v2481
      %2514 = vst.msk [vmem:[%s278 + $0x60] sm:$0xff] %vm1240, %v2482
      %2515 = vst.msk [vmem:[%s278 + $0x68] sm:$0xff] %vm1240, %v2483
      %2516 = vst.msk [vmem:[%s278 + $0x70] sm:$0xff] %vm1240, %v2484
      %2517 = vst.msk [vmem:[%s278 + $0x78] sm:$0xff] %vm1240, %v2485
      %2518 = vst.msk [vmem:[%s278 + $0x80] sm:$0xff] %vm1240, %v2486
      %2519 = vst.msk [vmem:[%s278 + $0x88] sm:$0xff] %vm1240, %v2487
      %2520 = vst.msk [vmem:[%s278 + $0x90] sm:$0xff] %vm1240, %v2488
      %2521 = vst.msk [vmem:[%s278 + $0x98] sm:$0xff] %vm1240, %v2489
      %2522 = vst.msk [vmem:[%s278 + $0xa0] sm:$0xff] %vm1240, %v2490
      %2523 = vst.msk [vmem:[%s278 + $0xa8] sm:$0xff] %vm1240, %v2491
      %2524 = vst.msk [vmem:[%s278 + $0xb0] sm:$0xff] %vm1240, %v2492
      %2525 = vst.msk [vmem:[%s278 + $0xb8] sm:$0xff] %vm1240, %v2493
      %2526 = vst.msk [vmem:[%s278 + $0xc0] sm:$0xff] %vm1240, %v2494
      %2527 = vst.msk [vmem:[%s278 + $0xc8] sm:$0xff] %vm1240, %v2495
      %2528 = vst.msk [vmem:[%s278 + $0xd0] sm:$0xff] %vm1240, %v2496
      %2529 = vst.msk [vmem:[%s278 + $0xd8] sm:$0xff] %vm1240, %v2497
      %2530 = vst.msk [vmem:[%s278 + $0xe0] sm:$0xff] %vm1240, %v2498
      %2531 = vst.msk [vmem:[%s278 + $0xe8] sm:$0xff] %vm1240, %v2499
      %2532 = vst.msk [vmem:[%s278 + $0xf0] sm:$0xff] %vm1240, %v2500
      %2533 = vst.msk [vmem:[%s278 + $0xf8] sm:$0xff] %vm1240, %v2501
      %p2534 = scmp.lt.s32.totalorder %s18, 1
      %s2535 = scalar_select %p2534, %s18, 1
      %s2536 = smul.addr %s2535, 32
      %s2537 = smul.addr %s2536, 8
      %s2538 = scalar_lea.vmem %s7, %s2537
      // Predicated region
      $region49: #{tpu_custom_call.1} parent=47 // pred_check
        %p2539 = pneg %p188
      $region50: #{tpu_custom_call.1} parent=47 // pred_check_branch
        %2541 = sbr.rel (%p2539) target = $region52
      $region51: #{tpu_custom_call.1} parent=47 // pred_region
        _
      $region52: #{tpu_custom_call.1} parent=47 // pred_fallthru
        _
    $region48: #{tpu_custom_call.1} parent=5 // pred_fallthru
      _
    %p2542 = scmp.le.s32.totalorder 2, %s13
    // Predicated region
    $region53: #{tpu_custom_call.1} parent=5 // pred_check
      %p2543 = pneg %p2542
    $region54: #{tpu_custom_call.1} parent=5 // pred_check_branch
      %2545 = sbr.rel (%p2543) target = $region56
    $region55: #{tpu_custom_call.1} parent=5 // pred_region
      %s2546 = ssub.s32 %s13, 2
      // Predicated region
      $region57: #{tpu_custom_call.1} parent=55 // pred_check
        %p2547 = pneg %p194
      $region58: #{tpu_custom_call.1} parent=55 // pred_check_branch
        %2549 = sbr.rel (%p2547) target = $region60
      $region59: #{tpu_custom_call.1} parent=55 // pred_region
        %p2550 = scmp.lt.s32.totalorder %s19, 1
        %s2551 = scalar_select %p2550, %s19, 1
        %s2552 = smul.addr %s2551, 32
        %s2553 = smul.addr %s2552, 8
        %s2554 = scalar_lea.vmem %s7, %s2553
      $region60: #{tpu_custom_call.1} parent=55 // pred_fallthru
        _
    $region56: #{tpu_custom_call.1} parent=5 // pred_fallthru
      _
  $region6: #{tpu_custom_call.1} parent=0 // loop_footer
    %s17 = sadd.s32 1, %s13
  $region7: #{tpu_custom_call.1} parent=0 // loop_footer_branch
    %12 = sbr.rel target = $region3
  $region8: #{tpu_custom_call.1} parent=0 // loop_exit
    _

</llo_original>
